<compile_context>
chip_gen: v7x
topology: tpu7x:2x2x1
jax: 0.10.0
libtpu: 0.0.40
codegen_flags: <defaults>
</compile_context>

<pallas_src>
import numpy as np

import jax
import jax.numpy as jnp
from jax.experimental import pallas as pl
from jax.experimental.pallas import tpu as pltpu


# ----------------------------------------------------------------------------
# Fused decoder kernel: one grid step == Bt batch elements.
# ----------------------------------------------------------------------------
def _decoder_kernel(z_ref, wfc_ref, bfc_ref, w1_ref, b1_ref, w2_ref, b2_ref,
                    w3_ref, b3_ref, o_ref):
    # fc + ReLU : (Bt, z_dim) @ (z_dim, F*h0^2)  -- lane-dense rows.
    t = jnp.dot(z_ref[...], wfc_ref[...], preferred_element_type=jnp.float32)
    t = jnp.maximum(t + bfc_ref[...], 0.0)

    # ConvTranspose2d(F, F, 4, stride=1, padding=1) + ReLU  (dense re-encoding)
    o1 = jnp.dot(t, w1_ref[...], preferred_element_type=jnp.float32)
    o1 = jnp.maximum(o1 + b1_ref[...], 0.0)

    # ConvTranspose2d(F, F, 4, stride=2, padding=2) + ReLU
    o2 = jnp.dot(o1, w2_ref[...], preferred_element_type=jnp.float32)
    o2 = jnp.maximum(o2 + b2_ref[...], 0.0)

    # ConvTranspose2d(F, c_dim, 4, stride=2, padding=1) + Sigmoid
    logits = jnp.dot(o2, w3_ref[...], preferred_element_type=jnp.float32)
    logits = logits + b3_ref[...]
    # exp -> EUP; approximate reciprocal also stays on the EUP slot.
    o_ref[...] = pl.reciprocal(1.0 + jnp.exp(-logits), approx=True)


# ----------------------------------------------------------------------------
# Wrapper
# ----------------------------------------------------------------------------
def decoder_forward(z, params, *, x_dim, filt_per_layer, c_dim, batch_tile=16):
    B, z_dim = z.shape
    F = filt_per_layer
    side = int(round(float(x_dim) ** 0.5))
    h0 = side // 4
    H1, H2, H3 = h0 + 1, 2 * h0, 4 * h0
    d0 = F * h0 * h0                 # fc output width (=128 in the demo)
    d1 = F * H1 * H1                 # layer-1 output width
    d2 = F * H2 * H2                 # layer-2 output width
    d3 = c_dim * H3 * H3             # layer-3 (NCHW-flattened) output width

    # Largest divisor of B not exceeding batch_tile.
    bt = min(batch_tile, B)
    while B % bt:
        bt -= 1

    out_flat = pl.pallas_call(
        _decoder_kernel,
        out_shape=jax.ShapeDtypeStruct((B, d3), jnp.float32),
        grid=(B // bt,),
        in_specs=[
            pl.BlockSpec((bt, z_dim), lambda i: (i, 0)),   # z batch tile
            pl.BlockSpec((z_dim, d0), lambda i: (0, 0)),   # fc weight (transposed)
            pl.BlockSpec((1, d0), lambda i: (0, 0)),       # fc bias
            pl.BlockSpec((d0, d1), lambda i: (0, 0)),      # conv-t 1 as dense matrix
            pl.BlockSpec((1, d1), lambda i: (0, 0)),       # bias 1 (per output col)
            pl.BlockSpec((d1, d2), lambda i: (0, 0)),      # conv-t 2
            pl.BlockSpec((1, d2), lambda i: (0, 0)),       # bias 2
            pl.BlockSpec((d2, d3), lambda i: (0, 0)),      # conv-t 3
            pl.BlockSpec((1, d3), lambda i: (0, 0)),       # bias 3
        ],
        out_specs=pl.BlockSpec((bt, d3), lambda i: (i, 0)),
        compiler_params=pltpu.CompilerParams(
            dimension_semantics=("parallel",)),
    )(z,
      params["fc_w"], params["fc_b"],
      params["w1"], params["b1"],
      params["w2"], params["b2"],
      params["w3"], params["b3"])

    # Free, contiguous reshape to NCHW (columns are ordered c*H3^2 + y*H3 + x).
    return out_flat.reshape(B, c_dim, side, side)


# ----------------------------------------------------------------------------
# Parameter init (PyTorch-convention tensors) + one-time layout conversion.
# ----------------------------------------------------------------------------
def _convtranspose_matrix(w, h_in, h_out, stride, padding):
    """Exact dense re-encoding of ConvTranspose2d.

    w: (Cin, Cout, K, K) PyTorch ConvTranspose2d weight.
    Returns M with shape (Cout*h_out^2, Cin*h_in^2) such that
      out_flat[co*h_out^2 + y*h_out + x] = sum_col M[row, col] * in_flat[col]
    with in_flat ordered ci*h_in^2 + a*h_in + b  (i.e. flattened NCHW maps).
    """
    w = np.asarray(w, np.float32)
    cin, cout, K, _ = w.shape
    M = np.zeros((cout * h_out * h_out, cin * h_in * h_in), np.float32)
    row_c = np.arange(cout)[:, None] * (h_out * h_out)
    col_c = np.arange(cin)[None, :] * (h_in * h_in)
    for a in range(h_in):
        for b in range(h_in):
            for ky in range(K):
                for kx in range(K):
                    y = a * stride - padding + ky
                    x = b * stride - padding + kx
                    if 0 <= y < h_out and 0 <= x < h_out:
                        # out[co, y, x] += in[ci, a, b] * w[ci, co, ky, kx]
                        M[row_c + (y * h_out + x),
                          col_c + (a * h_in + b)] += w[:, :, ky, kx].T
    return M


def init_params(key, z_dim, c_dim, x_dim, filt_per_layer):
    F = filt_per_layer
    side = int(round(float(x_dim) ** 0.5))
    h0 = side // 4
    H1, H2, H3 = h0 + 1, 2 * h0, 4 * h0
    K = 4
    dout = F * h0 * h0               # = filt_per_layer * x_dim / 16
    ks = jax.random.split(key, 8)

    # PyTorch-convention parameters (synthetic deterministic init).
    fc_w = 0.1 * jax.random.normal(ks[0], (dout, z_dim), jnp.float32)
    fc_b = 0.1 * jax.random.normal(ks[1], (dout,), jnp.float32)
    w1 = 0.1 * jax.random.normal(ks[2], (F, F, K, K), jnp.float32)
    b1 = 0.1 * jax.random.normal(ks[3], (F,), jnp.float32)
    w2 = 0.1 * jax.random.normal(ks[4], (F, F, K, K), jnp.float32)
    b2 = 0.1 * jax.random.normal(ks[5], (F,), jnp.float32)
    w3 = 0.1 * jax.random.normal(ks[6], (F, c_dim, K, K), jnp.float32)
    b3 = 0.1 * jax.random.normal(ks[7], (c_dim,), jnp.float32)

    torch_params = {"fc_w": fc_w, "fc_b": fc_b, "w1": w1, "b1": b1,
                    "w2": w2, "b2": b2, "w3": w3, "b3": b3}

    # One-time exact re-encoding of the three transposed convolutions.
    m1 = _convtranspose_matrix(w1, h0, H1, stride=1, padding=1)
    m2 = _convtranspose_matrix(w2, H1, H2, stride=2, padding=2)
    m3 = _convtranspose_matrix(w3, H2, H3, stride=2, padding=1)

    kernel_params = {
        "fc_w": fc_w.T,                                     # (z_dim, F*h0^2)
        "fc_b": fc_b.reshape(1, -1),
        "w1": jnp.asarray(m1.T),                            # (F*h0^2, F*H1^2)
        "b1": jnp.repeat(b1, H1 * H1)[None, :],
        "w2": jnp.asarray(m2.T),                            # (F*H1^2, F*H2^2)
        "b2": jnp.repeat(b2, H2 * H2)[None, :],
        "w3": jnp.asarray(m3.T),                            # (F*H2^2, c*H3^2)
        "b3": jnp.repeat(b3, H3 * H3)[None, :],
    }
    return torch_params, kernel_params


# ----------------------------------------------------------------------------
# Pure-JAX reference (PyTorch ConvTranspose2d semantics) for verification.
# ----------------------------------------------------------------------------
def _deconv_ref(x, w, b, stride, padding):
    K = w.shape[2]
    wf = jnp.transpose(jnp.flip(w, (2, 3)), (1, 0, 2, 3))   # (Cout, Cin, K, K)
    y = jax.lax.conv_general_dilated(
        x, wf, window_strides=(1, 1),
        padding=[(K - 1 - padding, K - 1 - padding)] * 2,
        lhs_dilation=(stride, stride),
        dimension_numbers=("NCHW", "OIHW", "NCHW"))
    return y + b.reshape(1, -1, 1, 1)


def decoder_reference(z, p, *, x_dim, filt_per_layer, c_dim):
    F = filt_per_layer
    side = int(round(float(x_dim) ** 0.5))
    h0 = side // 4
    t = jnp.maximum(z @ p["fc_w"].T + p["fc_b"], 0.0)
    x = t.reshape(z.shape[0], F, h0, h0)
    x = jnp.maximum(_deconv_ref(x, p["w1"], p["b1"], 1, 1), 0.0)
    x = jnp.maximum(_deconv_ref(x, p["w2"], p["b2"], 2, 2), 0.0)
    x = jax.nn.sigmoid(_deconv_ref(x, p["w3"], p["b3"], 2, 1))
    return x


if __name__ == "__main__":
    # Module-consistent small shapes: x_dim a perfect square, sqrt(x_dim) % 4 == 0.
    z_dim, c_dim, x_dim, filt_per_layer = 8, 3, 64, 32
    batch, batch_tile = 32, 16          # grid = (2,): even and >= 2 (v7x megacore)

    key = jax.random.PRNGKey(0)
    k_params, k_z = jax.random.split(key)
    torch_params, kparams = init_params(k_params, z_dim, c_dim, x_dim,
                                        filt_per_layer)
    z = jax.random.normal(k_z, (batch, z_dim), jnp.float32)

    out = decoder_forward(z, kparams, x_dim=x_dim,
                          filt_per_layer=filt_per_layer, c_dim=c_dim,
                          batch_tile=batch_tile)
    out = jax.block_until_ready(out)

    side = int(round(float(x_dim) ** 0.5))
    assert out.shape == (batch, c_dim, side, side), out.shape
    assert bool(jnp.all(jnp.isfinite(out)))
    # sigmoid range (small slack for the approximate EUP reciprocal)
    assert bool(jnp.all((out >= 0.0) & (out <= 1.0 + 1e-2)))

    ref = decoder_reference(z, torch_params, x_dim=x_dim,
                            filt_per_layer=filt_per_layer, c_dim=c_dim)
    max_err = float(jnp.max(jnp.abs(out - ref)))
    # approx-reciprocal sigmoid + MXU f32 accumulation order => ~1e-3-level diffs
    assert max_err < 2e-2, f"max abs error vs reference: {max_err}"

    print("KERNEL_OK")
</pallas_src>

<mosaic_0001>
module attributes {stable_mosaic.version = 11 : i64} {
  func.func @_decoder_kernel(%arg0: i32, %arg1: memref<16x8xf32, #tpu.memory_space<vmem>>, %arg2: memref<8x128xf32, #tpu.memory_space<vmem>>, %arg3: memref<1x128xf32, #tpu.memory_space<vmem>>, %arg4: memref<128x288xf32, #tpu.memory_space<vmem>>, %arg5: memref<1x288xf32, #tpu.memory_space<vmem>>, %arg6: memref<288x512xf32, #tpu.memory_space<vmem>>, %arg7: memref<1x512xf32, #tpu.memory_space<vmem>>, %arg8: memref<512x192xf32, #tpu.memory_space<vmem>>, %arg9: memref<1x192xf32, #tpu.memory_space<vmem>>, %arg10: memref<16x192xf32, #tpu.memory_space<vmem>>) attributes {dimension_semantics = [#tpu.dimension_semantics<parallel>], iteration_bounds = array<i64: 2>, scalar_prefetch = 0 : i64, scratch_operands = 0 : i64, tpu.core_type = #tpu.core_type<tc>, window_params = [{transform_indices = @transform_0, window_bounds = array<i64: 16, 8>}, {pipeline_mode = #tpu.pipeline_mode<synchronous>, transform_indices = @transform_1, window_bounds = array<i64: 8, 128>}, {pipeline_mode = #tpu.pipeline_mode<synchronous>, transform_indices = @transform_2, window_bounds = array<i64: 1, 128>}, {pipeline_mode = #tpu.pipeline_mode<synchronous>, transform_indices = @transform_3, window_bounds = array<i64: 128, 288>}, {pipeline_mode = #tpu.pipeline_mode<synchronous>, transform_indices = @transform_4, window_bounds = array<i64: 1, 288>}, {pipeline_mode = #tpu.pipeline_mode<synchronous>, transform_indices = @transform_5, window_bounds = array<i64: 288, 512>}, {pipeline_mode = #tpu.pipeline_mode<synchronous>, transform_indices = @transform_6, window_bounds = array<i64: 1, 512>}, {pipeline_mode = #tpu.pipeline_mode<synchronous>, transform_indices = @transform_7, window_bounds = array<i64: 512, 192>}, {pipeline_mode = #tpu.pipeline_mode<synchronous>, transform_indices = @transform_8, window_bounds = array<i64: 1, 192>}, {transform_indices = @transform_9, window_bounds = array<i64: 16, 192>}]} {
    %c0 = arith.constant 0 : index
    %c0_0 = arith.constant 0 : index
    %0 = vector.load %arg1[%c0, %c0_0] : memref<16x8xf32, #tpu.memory_space<vmem>>, vector<16x8xf32>
    %c0_1 = arith.constant 0 : index
    %c0_2 = arith.constant 0 : index
    %1 = vector.load %arg2[%c0_1, %c0_2] : memref<8x128xf32, #tpu.memory_space<vmem>>, vector<8x128xf32>
    %cst = arith.constant dense<0.000000e+00> : vector<16x128xf32>
    %2 = tpu.matmul %0, %1, %cst {dimension_numbers = #tpu.dot_dimension_numbers<[1], [0], [0], [1], [0, 0, 1, 1], [], []>} : vector<16x8xf32>, vector<8x128xf32>, vector<16x128xf32> -> vector<16x128xf32>
    %c0_3 = arith.constant 0 : index
    %c0_4 = arith.constant 0 : index
    %3 = vector.load %arg3[%c0_3, %c0_4] : memref<1x128xf32, #tpu.memory_space<vmem>>, vector<1x128xf32>
    %4 = vector.broadcast %3 : vector<1x128xf32> to vector<16x128xf32>
    %5 = arith.addf %2, %4 : vector<16x128xf32>
    %cst_5 = arith.constant 0.000000e+00 : f32
    %6 = vector.broadcast %cst_5 : f32 to vector<16x128xf32>
    %7 = arith.maximumf %5, %6 : vector<16x128xf32>
    %c0_6 = arith.constant 0 : index
    %c0_7 = arith.constant 0 : index
    %8 = vector.load %arg4[%c0_6, %c0_7] : memref<128x288xf32, #tpu.memory_space<vmem>>, vector<128x288xf32>
    %cst_8 = arith.constant dense<0.000000e+00> : vector<16x288xf32>
    %9 = tpu.matmul %7, %8, %cst_8 {dimension_numbers = #tpu.dot_dimension_numbers<[1], [0], [0], [1], [0, 0, 1, 1], [], []>} : vector<16x128xf32>, vector<128x288xf32>, vector<16x288xf32> -> vector<16x288xf32>
    %c0_9 = arith.constant 0 : index
    %c0_10 = arith.constant 0 : index
    %10 = vector.load %arg5[%c0_9, %c0_10] : memref<1x288xf32, #tpu.memory_space<vmem>>, vector<1x288xf32>
    %11 = vector.broadcast %10 : vector<1x288xf32> to vector<16x288xf32>
    %12 = arith.addf %9, %11 : vector<16x288xf32>
    %cst_11 = arith.constant 0.000000e+00 : f32
    %13 = vector.broadcast %cst_11 : f32 to vector<16x288xf32>
    %14 = arith.maximumf %12, %13 : vector<16x288xf32>
    %c0_12 = arith.constant 0 : index
    %c0_13 = arith.constant 0 : index
    %15 = vector.load %arg6[%c0_12, %c0_13] : memref<288x512xf32, #tpu.memory_space<vmem>>, vector<288x512xf32>
    %cst_14 = arith.constant dense<0.000000e+00> : vector<16x512xf32>
    %16 = tpu.matmul %14, %15, %cst_14 {dimension_numbers = #tpu.dot_dimension_numbers<[1], [0], [0], [1], [0, 0, 1, 1], [], []>} : vector<16x288xf32>, vector<288x512xf32>, vector<16x512xf32> -> vector<16x512xf32>
    %c0_15 = arith.constant 0 : index
    %c0_16 = arith.constant 0 : index
    %17 = vector.load %arg7[%c0_15, %c0_16] : memref<1x512xf32, #tpu.memory_space<vmem>>, vector<1x512xf32>
    %18 = vector.broadcast %17 : vector<1x512xf32> to vector<16x512xf32>
    %19 = arith.addf %16, %18 : vector<16x512xf32>
    %cst_17 = arith.constant 0.000000e+00 : f32
    %20 = vector.broadcast %cst_17 : f32 to vector<16x512xf32>
    %21 = arith.maximumf %19, %20 : vector<16x512xf32>
    %c0_18 = arith.constant 0 : index
    %c0_19 = arith.constant 0 : index
    %22 = vector.load %arg8[%c0_18, %c0_19] : memref<512x192xf32, #tpu.memory_space<vmem>>, vector<512x192xf32>
    %cst_20 = arith.constant dense<0.000000e+00> : vector<16x192xf32>
    %23 = tpu.matmul %21, %22, %cst_20 {dimension_numbers = #tpu.dot_dimension_numbers<[1], [0], [0], [1], [0, 0, 1, 1], [], []>} : vector<16x512xf32>, vector<512x192xf32>, vector<16x192xf32> -> vector<16x192xf32>
    %c0_21 = arith.constant 0 : index
    %c0_22 = arith.constant 0 : index
    %24 = vector.load %arg9[%c0_21, %c0_22] : memref<1x192xf32, #tpu.memory_space<vmem>>, vector<1x192xf32>
    %25 = vector.broadcast %24 : vector<1x192xf32> to vector<16x192xf32>
    %26 = arith.addf %23, %25 : vector<16x192xf32>
    %cst_23 = arith.constant 0.000000e+00 : f32
    %27 = vector.broadcast %cst_23 : f32 to vector<16x192xf32>
    %28 = arith.subf %27, %26 : vector<16x192xf32>
    %29 = math.exp %28 : vector<16x192xf32>
    %cst_24 = arith.constant 1.000000e+00 : f32
    %30 = vector.broadcast %cst_24 : f32 to vector<16x192xf32>
    %31 = arith.addf %30, %29 : vector<16x192xf32>
    %32 = tpu.reciprocal %31 {approx = true} : vector<16x192xf32> -> vector<16x192xf32>
    %c0_25 = arith.constant 0 : index
    %c0_26 = arith.constant 0 : index
    %33 = vector.load %arg10[%c0_25, %c0_26] : memref<16x192xf32, #tpu.memory_space<vmem>>, vector<16x192xf32>
    tpu.vector_store %arg10[%c0_25, %c0_26], %32 {strides = array<i32>} : memref<16x192xf32, #tpu.memory_space<vmem>>, vector<16x192xf32>,
    return
  }
  func.func @transform_0(%arg0: i32) -> (i32, i32) {
    %c0_i32 = arith.constant 0 : i32
    %c0_i32_0 = arith.constant 0 : i32
    return %arg0, %c0_i32 : i32, i32
  }
  func.func @transform_1(%arg0: i32) -> (i32, i32) {
    %c0_i32 = arith.constant 0 : i32
    %c0_i32_0 = arith.constant 0 : i32
    %c0_i32_1 = arith.constant 0 : i32
    return %c0_i32, %c0_i32_0 : i32, i32
  }
  func.func @transform_2(%arg0: i32) -> (i32, i32) {
    %c0_i32 = arith.constant 0 : i32
    %c0_i32_0 = arith.constant 0 : i32
    %c0_i32_1 = arith.constant 0 : i32
    return %c0_i32, %c0_i32_0 : i32, i32
  }
  func.func @transform_3(%arg0: i32) -> (i32, i32) {
    %c0_i32 = arith.constant 0 : i32
    %c0_i32_0 = arith.constant 0 : i32
    %c0_i32_1 = arith.constant 0 : i32
    return %c0_i32, %c0_i32_0 : i32, i32
  }
  func.func @transform_4(%arg0: i32) -> (i32, i32) {
    %c0_i32 = arith.constant 0 : i32
    %c0_i32_0 = arith.constant 0 : i32
    %c0_i32_1 = arith.constant 0 : i32
    return %c0_i32, %c0_i32_0 : i32, i32
  }
  func.func @transform_5(%arg0: i32) -> (i32, i32) {
    %c0_i32 = arith.constant 0 : i32
    %c0_i32_0 = arith.constant 0 : i32
    %c0_i32_1 = arith.constant 0 : i32
    return %c0_i32, %c0_i32_0 : i32, i32
  }
  func.func @transform_6(%arg0: i32) -> (i32, i32) {
    %c0_i32 = arith.constant 0 : i32
    %c0_i32_0 = arith.constant 0 : i32
    %c0_i32_1 = arith.constant 0 : i32
    return %c0_i32, %c0_i32_0 : i32, i32
  }
  func.func @transform_7(%arg0: i32) -> (i32, i32) {
    %c0_i32 = arith.constant 0 : i32
    %c0_i32_0 = arith.constant 0 : i32
    %c0_i32_1 = arith.constant 0 : i32
    return %c0_i32, %c0_i32_0 : i32, i32
  }
  func.func @transform_8(%arg0: i32) -> (i32, i32) {
    %c0_i32 = arith.constant 0 : i32
    %c0_i32_0 = arith.constant 0 : i32
    %c0_i32_1 = arith.constant 0 : i32
    return %c0_i32, %c0_i32_0 : i32, i32
  }
  func.func @transform_9(%arg0: i32) -> (i32, i32) {
    %c0_i32 = arith.constant 0 : i32
    %c0_i32_0 = arith.constant 0 : i32
    return %arg0, %c0_i32 : i32, i32
  }
}

</mosaic_0001>

<llo_original>
// kernel: tpu_custom_call.1
$region0: #{tpu_custom_call.1}
  #allocation0 [shape = 'u32[]', space=smem, size = 0x4, offset = 0x4, fixed_abs, tag = 'smem constant byte address 0x4 - core index']
  #allocation1 [shape = 'u32[144,128]{1,0:T(1,128)}', space=vmem, size = 0x12000, scoped, tag = 'internal scratch']
  %s0 = inlined_call_operand.vmem [shape: f32[32,8], index: 0, kind: input, shape index: {}]
  %s1 = inlined_call_operand.vmem [shape: f32[8,128], index: 1, kind: input, shape index: {}]
  %s2 = inlined_call_operand.vmem [shape: f32[1,128], index: 2, kind: input, shape index: {}]
  %s3 = inlined_call_operand.vmem [shape: f32[128,288], index: 3, kind: input, shape index: {}]
  %s4 = inlined_call_operand.vmem [shape: f32[1,288], index: 4, kind: input, shape index: {}]
  %s5 = inlined_call_operand.vmem [shape: f32[288,512], index: 5, kind: input, shape index: {}]
  %s6 = inlined_call_operand.vmem [shape: f32[1,512], index: 6, kind: input, shape index: {}]
  %s7 = inlined_call_operand.vmem [shape: f32[512,192], index: 7, kind: input, shape index: {}]
  %s8 = inlined_call_operand.vmem [shape: f32[1,192], index: 8, kind: input, shape index: {}]
  %s9 = inlined_call_operand.hbm [shape: f32[32,192], index: 9, kind: output, shape index: {}]
  %s10 = sld [smem:[#allocation0]]
  $region69: #{tpu_custom_call.1} parent=0
    _
  %s12 = ssub.s32 1, %s10
  %s13 = scalar_select 0, %s12, %s10
  $region1: #{tpu_custom_call.1} parent=0
    #allocation2 [shape = 'u8[32768]{0}', space=vmem, size = 0x8000, scoped, tag = 'output window, operand 0']
    #allocation3 [shape = 's32[2]{0}', space=sflag, size = 0x8, scoped, tag = 'scoped memory for tpu_custom_call.1']
    %14 = vsyncpa [#allocation3], 0
    %s15 = scalar_lea.sflag [#allocation3], 1
    %16 = vsyncpa %s15, 0
    loop: start=0, step=1, limit=4
    $region2: #{tpu_custom_call.1} parent=1 // loop_pre_header
      _
    $region3: #{tpu_custom_call.1} parent=1 // loop_header
      %s18 = sphi 0, %s22
      %p19 = scmp.ge.s32.totalorder %s18, 4
      %s28 = sphi 0, %s30
      %s31 = sphi 0, %s28
      %s32 = sphi 0, %s31
      %s48 = sphi 0, %s32
      %s52 = sphi 0, %s52
      %s54 = sphi 0, %s52
      %s55 = sphi 0, %s54
      %s69 = sphi 0, %s55
      %s73 = sphi 0, %s73
      %s75 = sphi 0, %s73
      %s76 = sphi 0, %s75
      %s90 = sphi 0, %s76
      %s94 = sphi 0, %s94
      %s96 = sphi 0, %s94
      %s97 = sphi 0, %s96
      %s111 = sphi 0, %s97
      %s115 = sphi 0, %s115
      %s117 = sphi 0, %s115
      %s118 = sphi 0, %s117
      %s132 = sphi 0, %s118
      %s136 = sphi 0, %s136
      %s138 = sphi 0, %s136
      %s139 = sphi 0, %s138
      %s153 = sphi 0, %s139
      %s157 = sphi 0, %s157
      %s159 = sphi 0, %s157
      %s160 = sphi 0, %s159
      %s174 = sphi 0, %s160
      %s178 = sphi 0, %s178
      %s180 = sphi 0, %s178
      %s181 = sphi 0, %s180
      %s195 = sphi 0, %s181
      %s199 = sphi 0, %s199
      %s201 = sphi 0, %s199
      %s202 = sphi 0, %s201
      %s216 = sphi 0, %s202
      %s222 = sphi 0, %s224
      %s225 = sphi 0, %s222
      %s226 = sphi 0, %s225
      %s242 = sphi 0, %s226
    $region4: #{tpu_custom_call.1} parent=1 // loop_header_branch
      %21 = sbr.rel (%p19) target = $region8
    $region5: #{tpu_custom_call.1} parent=1 // loop_body
      %s23 = ssub.s32 %s18, 1
      %s24 = ssub.s32 %s18, 2
      %s25 = sadd.s32 %s18, 1
      %s26 = ssub.s32 %s18, %s25
      %p27 = scmp.eq.s32.totalorder %s26, 0
      %s29 = sadd.s32 %s28, 1
      %s30 = scalar_select %p27, %s28, %s29
      %p33 = pneg %p27
      %p34 = scmp.eq.s32.totalorder %s18, 1
      %p35 = por %p33, %p34
      %p36 = scmp.ne.s32.totalorder %s28, %s31
      %p37 = scmp.eq.s32.totalorder %s18, 0
      %p38 = por %p36, %p37
      %p39 = scmp.ne.s32.totalorder %s28, %s31
      %p40 = scmp.eq.s32.totalorder %s23, 1
      %p41 = por %p39, %p40
      %p42 = scmp.ne.s32.totalorder %s31, %s32
      %p43 = scmp.eq.s32.totalorder %s23, 0
      %p44 = por %p42, %p43
      %p45 = scmp.ne.s32.totalorder %s31, %s32
      %p46 = scmp.eq.s32.totalorder %s24, 1
      %p47 = por %p45, %p46
      %p49 = scmp.ne.s32.totalorder %s32, %s48
      %p50 = scmp.eq.s32.totalorder %s24, 0
      %p51 = por %p49, %p50
      %s53 = sadd.s32 %s52, 1
      %p56 = scmp.eq.s32.totalorder %s18, 1
      %p57 = scmp.ne.s32.totalorder %s52, %s54
      %p58 = scmp.eq.s32.totalorder %s18, 0
      %p59 = por %p57, %p58
      %p60 = scmp.ne.s32.totalorder %s52, %s54
      %p61 = scmp.eq.s32.totalorder %s23, 1
      %p62 = por %p60, %p61
      %p63 = scmp.ne.s32.totalorder %s54, %s55
      %p64 = scmp.eq.s32.totalorder %s23, 0
      %p65 = por %p63, %p64
      %p66 = scmp.ne.s32.totalorder %s54, %s55
      %p67 = scmp.eq.s32.totalorder %s24, 1
      %p68 = por %p66, %p67
      %p70 = scmp.ne.s32.totalorder %s55, %s69
      %p71 = scmp.eq.s32.totalorder %s24, 0
      %p72 = por %p70, %p71
      %s74 = sadd.s32 %s73, 1
      %p77 = scmp.eq.s32.totalorder %s18, 1
      %p78 = scmp.ne.s32.totalorder %s73, %s75
      %p79 = scmp.eq.s32.totalorder %s18, 0
      %p80 = por %p78, %p79
      %p81 = scmp.ne.s32.totalorder %s73, %s75
      %p82 = scmp.eq.s32.totalorder %s23, 1
      %p83 = por %p81, %p82
      %p84 = scmp.ne.s32.totalorder %s75, %s76
      %p85 = scmp.eq.s32.totalorder %s23, 0
      %p86 = por %p84, %p85
      %p87 = scmp.ne.s32.totalorder %s75, %s76
      %p88 = scmp.eq.s32.totalorder %s24, 1
      %p89 = por %p87, %p88
      %p91 = scmp.ne.s32.totalorder %s76, %s90
      %p92 = scmp.eq.s32.totalorder %s24, 0
      %p93 = por %p91, %p92
      %s95 = sadd.s32 %s94, 1
      %p98 = scmp.eq.s32.totalorder %s18, 1
      %p99 = scmp.ne.s32.totalorder %s94, %s96
      %p100 = scmp.eq.s32.totalorder %s18, 0
      %p101 = por %p99, %p100
      %p102 = scmp.ne.s32.totalorder %s94, %s96
      %p103 = scmp.eq.s32.totalorder %s23, 1
      %p104 = por %p102, %p103
      %p105 = scmp.ne.s32.totalorder %s96, %s97
      %p106 = scmp.eq.s32.totalorder %s23, 0
      %p107 = por %p105, %p106
      %p108 = scmp.ne.s32.totalorder %s96, %s97
      %p109 = scmp.eq.s32.totalorder %s24, 1
      %p110 = por %p108, %p109
      %p112 = scmp.ne.s32.totalorder %s97, %s111
      %p113 = scmp.eq.s32.totalorder %s24, 0
      %p114 = por %p112, %p113
      %s116 = sadd.s32 %s115, 1
      %p119 = scmp.eq.s32.totalorder %s18, 1
      %p120 = scmp.ne.s32.totalorder %s115, %s117
      %p121 = scmp.eq.s32.totalorder %s18, 0
      %p122 = por %p120, %p121
      %p123 = scmp.ne.s32.totalorder %s115, %s117
      %p124 = scmp.eq.s32.totalorder %s23, 1
      %p125 = por %p123, %p124
      %p126 = scmp.ne.s32.totalorder %s117, %s118
      %p127 = scmp.eq.s32.totalorder %s23, 0
      %p128 = por %p126, %p127
      %p129 = scmp.ne.s32.totalorder %s117, %s118
      %p130 = scmp.eq.s32.totalorder %s24, 1
      %p131 = por %p129, %p130
      %p133 = scmp.ne.s32.totalorder %s118, %s132
      %p134 = scmp.eq.s32.totalorder %s24, 0
      %p135 = por %p133, %p134
      %s137 = sadd.s32 %s136, 1
      %p140 = scmp.eq.s32.totalorder %s18, 1
      %p141 = scmp.ne.s32.totalorder %s136, %s138
      %p142 = scmp.eq.s32.totalorder %s18, 0
      %p143 = por %p141, %p142
      %p144 = scmp.ne.s32.totalorder %s136, %s138
      %p145 = scmp.eq.s32.totalorder %s23, 1
      %p146 = por %p144, %p145
      %p147 = scmp.ne.s32.totalorder %s138, %s139
      %p148 = scmp.eq.s32.totalorder %s23, 0
      %p149 = por %p147, %p148
      %p150 = scmp.ne.s32.totalorder %s138, %s139
      %p151 = scmp.eq.s32.totalorder %s24, 1
      %p152 = por %p150, %p151
      %p154 = scmp.ne.s32.totalorder %s139, %s153
      %p155 = scmp.eq.s32.totalorder %s24, 0
      %p156 = por %p154, %p155
      %s158 = sadd.s32 %s157, 1
      %p161 = scmp.eq.s32.totalorder %s18, 1
      %p162 = scmp.ne.s32.totalorder %s157, %s159
      %p163 = scmp.eq.s32.totalorder %s18, 0
      %p164 = por %p162, %p163
      %p165 = scmp.ne.s32.totalorder %s157, %s159
      %p166 = scmp.eq.s32.totalorder %s23, 1
      %p167 = por %p165, %p166
      %p168 = scmp.ne.s32.totalorder %s159, %s160
      %p169 = scmp.eq.s32.totalorder %s23, 0
      %p170 = por %p168, %p169
      %p171 = scmp.ne.s32.totalorder %s159, %s160
      %p172 = scmp.eq.s32.totalorder %s24, 1
      %p173 = por %p171, %p172
      %p175 = scmp.ne.s32.totalorder %s160, %s174
      %p176 = scmp.eq.s32.totalorder %s24, 0
      %p177 = por %p175, %p176
      %s179 = sadd.s32 %s178, 1
      %p182 = scmp.eq.s32.totalorder %s18, 1
      %p183 = scmp.ne.s32.totalorder %s178, %s180
      %p184 = scmp.eq.s32.totalorder %s18, 0
      %p185 = por %p183, %p184
      %p186 = scmp.ne.s32.totalorder %s178, %s180
      %p187 = scmp.eq.s32.totalorder %s23, 1
      %p188 = por %p186, %p187
      %p189 = scmp.ne.s32.totalorder %s180, %s181
      %p190 = scmp.eq.s32.totalorder %s23, 0
      %p191 = por %p189, %p190
      %p192 = scmp.ne.s32.totalorder %s180, %s181
      %p193 = scmp.eq.s32.totalorder %s24, 1
      %p194 = por %p192, %p193
      %p196 = scmp.ne.s32.totalorder %s181, %s195
      %p197 = scmp.eq.s32.totalorder %s24, 0
      %p198 = por %p196, %p197
      %s200 = sadd.s32 %s199, 1
      %p203 = scmp.eq.s32.totalorder %s18, 1
      %p204 = scmp.ne.s32.totalorder %s199, %s201
      %p205 = scmp.eq.s32.totalorder %s18, 0
      %p206 = por %p204, %p205
      %p207 = scmp.ne.s32.totalorder %s199, %s201
      %p208 = scmp.eq.s32.totalorder %s23, 1
      %p209 = por %p207, %p208
      %p210 = scmp.ne.s32.totalorder %s201, %s202
      %p211 = scmp.eq.s32.totalorder %s23, 0
      %p212 = por %p210, %p211
      %p213 = scmp.ne.s32.totalorder %s201, %s202
      %p214 = scmp.eq.s32.totalorder %s24, 1
      %p215 = por %p213, %p214
      %p217 = scmp.ne.s32.totalorder %s202, %s216
      %p218 = scmp.eq.s32.totalorder %s24, 0
      %p219 = por %p217, %p218
      %s220 = ssub.s32 %s18, %s25
      %p221 = scmp.eq.s32.totalorder %s220, 0
      %s223 = sadd.s32 %s222, 1
      %s224 = scalar_select %p221, %s222, %s223
      %p227 = pneg %p221
      %p228 = scmp.eq.s32.totalorder %s18, 1
      %p229 = por %p227, %p228
      %p230 = scmp.ne.s32.totalorder %s222, %s225
      %p231 = scmp.eq.s32.totalorder %s18, 0
      %p232 = por %p230, %p231
      %p233 = scmp.ne.s32.totalorder %s222, %s225
      %p234 = scmp.eq.s32.totalorder %s23, 1
      %p235 = por %p233, %p234
      %p236 = scmp.ne.s32.totalorder %s225, %s226
      %p237 = scmp.eq.s32.totalorder %s23, 0
      %p238 = por %p236, %p237
      %p239 = scmp.ne.s32.totalorder %s225, %s226
      %p240 = scmp.eq.s32.totalorder %s24, 1
      %p241 = por %p239, %p240
      %p243 = scmp.ne.s32.totalorder %s226, %s242
      %p244 = scmp.eq.s32.totalorder %s24, 0
      %p245 = por %p243, %p244
      %p246 = scmp.le.s32.totalorder 1, %s18
      %p247 = scmp.lt.s32.totalorder %s18, 3
      %p248 = pnand %p246, %p247
      %p249 = pneg %p248
      // Predicated region
      $region9: #{tpu_custom_call.1} parent=5 // pred_check
        _
      $region10: #{tpu_custom_call.1} parent=5 // pred_check_branch
        %251 = sbr.rel (%p248) target = $region12
      $region11: #{tpu_custom_call.1} parent=5 // pred_region
        %s252 = ssub.s32 %s18, 1
        // Predicated region
        $region13: #{tpu_custom_call.1} parent=11 // pred_check
          %p253 = pneg %p65
        $region14: #{tpu_custom_call.1} parent=11 // pred_check_branch
          %255 = sbr.rel (%p253) target = $region16
        $region15: #{tpu_custom_call.1} parent=11 // pred_region
          _
        $region16: #{tpu_custom_call.1} parent=11 // pred_fallthru
          _
        // Predicated region
        $region17: #{tpu_custom_call.1} parent=11 // pred_check
          %p256 = pneg %p86
        $region18: #{tpu_custom_call.1} parent=11 // pred_check_branch
          %258 = sbr.rel (%p256) target = $region20
        $region19: #{tpu_custom_call.1} parent=11 // pred_region
          _
        $region20: #{tpu_custom_call.1} parent=11 // pred_fallthru
          _
        // Predicated region
        $region21: #{tpu_custom_call.1} parent=11 // pred_check
          %p259 = pneg %p107
        $region22: #{tpu_custom_call.1} parent=11 // pred_check_branch
          %261 = sbr.rel (%p259) target = $region24
        $region23: #{tpu_custom_call.1} parent=11 // pred_region
          _
        $region24: #{tpu_custom_call.1} parent=11 // pred_fallthru
          _
        // Predicated region
        $region25: #{tpu_custom_call.1} parent=11 // pred_check
          %p262 = pneg %p128
        $region26: #{tpu_custom_call.1} parent=11 // pred_check_branch
          %264 = sbr.rel (%p262) target = $region28
        $region27: #{tpu_custom_call.1} parent=11 // pred_region
          _
        $region28: #{tpu_custom_call.1} parent=11 // pred_fallthru
          _
        // Predicated region
        $region29: #{tpu_custom_call.1} parent=11 // pred_check
          %p265 = pneg %p149
        $region30: #{tpu_custom_call.1} parent=11 // pred_check_branch
          %267 = sbr.rel (%p265) target = $region32
        $region31: #{tpu_custom_call.1} parent=11 // pred_region
          _
        $region32: #{tpu_custom_call.1} parent=11 // pred_fallthru
          _
        // Predicated region
        $region33: #{tpu_custom_call.1} parent=11 // pred_check
          %p268 = pneg %p170
        $region34: #{tpu_custom_call.1} parent=11 // pred_check_branch
          %270 = sbr.rel (%p268) target = $region36
        $region35: #{tpu_custom_call.1} parent=11 // pred_region
          _
        $region36: #{tpu_custom_call.1} parent=11 // pred_fallthru
          _
        // Predicated region
        $region37: #{tpu_custom_call.1} parent=11 // pred_check
          %p271 = pneg %p191
        $region38: #{tpu_custom_call.1} parent=11 // pred_check_branch
          %273 = sbr.rel (%p271) target = $region40
        $region39: #{tpu_custom_call.1} parent=11 // pred_region
          _
        $region40: #{tpu_custom_call.1} parent=11 // pred_fallthru
          _
        // Predicated region
        $region41: #{tpu_custom_call.1} parent=11 // pred_check
          %p274 = pneg %p212
        $region42: #{tpu_custom_call.1} parent=11 // pred_check_branch
          %276 = sbr.rel (%p274) target = $region44
        $region43: #{tpu_custom_call.1} parent=11 // pred_region
          _
        $region44: #{tpu_custom_call.1} parent=11 // pred_fallthru
          _
      $region12: #{tpu_custom_call.1} parent=5 // pred_fallthru
        _
      %p277 = scmp.lt.s32.totalorder %s18, 2
      // Predicated region
      $region45: #{tpu_custom_call.1} parent=5 // pred_check
        %p278 = pneg %p277
      $region46: #{tpu_custom_call.1} parent=5 // pred_check_branch
        %280 = sbr.rel (%p278) target = $region48
      $region47: #{tpu_custom_call.1} parent=5 // pred_region
        // Predicated region
        $region49: #{tpu_custom_call.1} parent=47 // pred_check
          %p281 = pneg %p38
        $region50: #{tpu_custom_call.1} parent=47 // pred_check_branch
          %283 = sbr.rel (%p281) target = $region52
        $region51: #{tpu_custom_call.1} parent=47 // pred_region
          %s284 = smul.u32 2, %s18
          %p285 = scmp.lt.s32.totalorder %s284, 3
          %s286 = scalar_select %p285, %s284, 3
          %s287 = smul.addr %s286, 8
          %s288 = scalar_lea.vmem %s0, %s287
          %s289 = smul.u32 2, %s18
        $region52: #{tpu_custom_call.1} parent=47 // pred_fallthru
          _
      $region48: #{tpu_custom_call.1} parent=5 // pred_fallthru
        _
      %p290 = scmp.le.s32.totalorder 1, %s18
      %p291 = scmp.lt.s32.totalorder %s18, 3
      %p292 = pnand %p290, %p291
      %p293 = pneg %p292
      // Predicated region
      $region53: #{tpu_custom_call.1} parent=5 // pred_check
        _
      $region54: #{tpu_custom_call.1} parent=5 // pred_check_branch
        %295 = sbr.rel (%p292) target = $region56
      $region55: #{tpu_custom_call.1} parent=5 // pred_region
        %s296 = ssub.s32 %s18, 1
        %s297 = smul.u32 2, %s23
        %p298 = scmp.lt.s32.totalorder %s297, 3
        %s299 = scalar_select %p298, %s297, 3
        %s300 = smul.addr %s299, 8
        %s301 = scalar_lea.vmem %s0, %s300
        %p302 = pneg %p44
        %p303 = pneg %p41
        %p304 = pneg %p65
        %p305 = pneg %p62
        %p306 = pneg %p86
        %p307 = pneg %p83
        %p308 = pneg %p107
        %p309 = pneg %p104
        %p310 = pneg %p128
        %p311 = pneg %p125
        %p312 = pneg %p149
        %p313 = pneg %p146
        %p314 = pneg %p170
        %p315 = pneg %p167
        %p316 = pneg %p191
        %p317 = pneg %p188
        %p318 = pneg %p212
        %p319 = pneg %p209
        %p320 = pneg %p238
        %p321 = pneg %p235
        %s322 = sand.u32 %s225, 1
        %s323 = scalar_lea.sflag [#allocation3], %s322
        %s324 = sand.u32 %s225, 1
        %s325 = smul.addr %s324, 32
        %s326 = scalar_lea.vmem [#allocation2], %s325
        %s327 = smul.u32 2, %s23
        %p328 = scmp.lt.s32.totalorder %s327, 3
        %s329 = scalar_select %p328, %s327, 3
        %s330 = smul.addr %s329, 8
        %s331 = scalar_lea.vmem %s0, %s330
        %s332 = smul.u32 2, %s23
        %s333 = smul.u32 2, %s23
        %v334 = vld [vmem:[%s331] sm:$0xff]
        %v335 = vld [vmem:[%s331 + $0x8] sm:$0xff]
        %v336 = vld [vmem:[%s1] sm:$0xff]
        %v337 = vld [vmem:[%s2] sm:$0x1]
        %v339 = vlaneseq
        %v340 = vshrl.u32 %v339, 7
        %v341 = vsub.s32 0, %v340
        %v342 = vrot.slane %v337, %v341
        %vm344 = vcmask 64512
        %v346 = vsel %vm344, %v334, 0
        %v349 = vsel %vm344, %v335, 0
        %351 = vmatprep.subr.mxu0 0.0
        %352 = vmatpush1.msra.mxu0 %v336
        %353 = vmatprep.subr.mxu0 0.0
        %354 = vmatpush1.msra.mxu0 0.0
        %355 = vmatprep.subr.mxu0 0.0
        %356 = vmatpush1.msra.mxu0 0.0
        %357 = vmatprep.subr.mxu0 0.0
        %358 = vmatpush1.msra.mxu0 0.0
        %359 = vmatprep.subr.mxu0 0.0
        %360 = vmatpush1.msra.mxu0 0.0
        %361 = vmatprep.subr.mxu0 0.0
        %362 = vmatpush1.msra.mxu0 0.0
        %363 = vmatprep.subr.mxu0 0.0
        %364 = vmatpush1.msra.mxu0 0.0
        %365 = vmatprep.subr.mxu0 0.0
        %366 = vmatpush1.msra.mxu0 0.0
        %367 = vmatprep.subr.mxu0 0.0
        %368 = vmatpush1.msra.mxu0 0.0
        %369 = vmatprep.subr.mxu0 0.0
        %370 = vmatpush1.msra.mxu0 0.0
        %371 = vmatprep.subr.mxu0 0.0
        %372 = vmatpush1.msra.mxu0 0.0
        %373 = vmatprep.subr.mxu0 0.0
        %374 = vmatpush1.msra.mxu0 0.0
        %375 = vmatprep.subr.mxu0 0.0
        %376 = vmatpush1.msra.mxu0 0.0
        %377 = vmatprep.subr.mxu0 0.0
        %378 = vmatpush1.msra.mxu0 0.0
        %379 = vmatprep.subr.mxu0 0.0
        %380 = vmatpush1.msra.mxu0 0.0
        %381 = vmatprep.subr.mxu0 0.0
        %382 = vmatpush1.msra.mxu0 0.0
        %383 = vmatprep.subr.mxu0 0.0
        %384 = vmatpush1.msra.mxu0 0.0
        %385 = vmatprep.subr.mxu0 0.0
        %386 = vmatpush1.msra.mxu0 0.0
        %387 = vmatprep.subr.mxu0 0.0
        %388 = vmatpush1.msra.mxu0 0.0
        %389 = vmatprep.subr.mxu0 0.0
        %390 = vmatpush1.msra.mxu0 0.0
        %391 = vmatprep.subr.mxu0 0.0
        %392 = vmatpush1.msra.mxu0 0.0
        %393 = vmatprep.subr.mxu0 0.0
        %394 = vmatpush1.msra.mxu0 0.0
        %395 = vmatprep.subr.mxu0 0.0
        %396 = vmatpush1.msra.mxu0 0.0
        %397 = vmatprep.subr.mxu0 0.0
        %398 = vmatpush1.msra.mxu0 0.0
        %399 = vmatprep.subr.mxu0 0.0
        %400 = vmatpush1.msra.mxu0 0.0
        %401 = vmatprep.subr.mxu0 0.0
        %402 = vmatpush1.msra.mxu0 0.0
        %403 = vmatprep.subr.mxu0 0.0
        %404 = vmatpush1.msra.mxu0 0.0
        %405 = vmatprep.subr.mxu0 0.0
        %406 = vmatpush1.msra.mxu0 0.0
        %407 = vmatprep.subr.mxu0 0.0
        %408 = vmatpush1.msra.mxu0 0.0
        %409 = vmatprep.subr.mxu0 0.0
        %410 = vmatpush1.msra.mxu0 0.0
        %411 = vmatprep.subr.mxu0 0.0
        %412 = vmatpush1.msra.mxu0 0.0
        %413 = vmatprep.subr.mxu0 0.0
        %414 = vmatpush1.msra.mxu0 0.0
        %415 = vmatprep.mubr.f32.mxu0 0.0
        %416 = vmatmul.mubr.f32.gmra.mrb[0].mxu0 %v346
        %v417 = vpop.f32.mrb[0].mxu0
        %v418 = vadd.f32 %v342, %v417
        %v419 = vpop.f32.mrb[0].mxu0
        %420 = vmatprep.mubr.f32.mxu0 0.0
        %421 = vmatmul.mubr.f32.gmra.mrb[0].mxu0 %v349
        %v422 = vpop.f32.mrb[0].mxu0
        %v423 = vadd.f32 %v342, %v422
        %v424 = vpop.f32.mrb[0].mxu0
        %425 = vdwg.mxu0
        %v426 = vmax.f32 %v418, 0.0
        %v427 = vmax.f32 %v423, 0.0
        %v428 = vld [vmem:[%s3] sm:$0xff]
        %v429 = vld [vmem:[%s3 + $0x8] sm:$0xff]
        %v430 = vld [vmem:[%s3 + $0x10] sm:$0xff]
        %v431 = vld [vmem:[%s3 + $0x18] sm:$0xff]
        %v432 = vld [vmem:[%s3 + $0x20] sm:$0xff]
        %v433 = vld [vmem:[%s3 + $0x28] sm:$0xff]
        %v434 = vld [vmem:[%s3 + $0x30] sm:$0xff]
        %v435 = vld [vmem:[%s3 + $0x38] sm:$0xff]
        %v436 = vld [vmem:[%s3 + $0x40] sm:$0xff]
        %v437 = vld [vmem:[%s3 + $0x48] sm:$0xff]
        %v438 = vld [vmem:[%s3 + $0x50] sm:$0xff]
        %v439 = vld [vmem:[%s3 + $0x58] sm:$0xff]
        %v440 = vld [vmem:[%s3 + $0x60] sm:$0xff]
        %v441 = vld [vmem:[%s3 + $0x68] sm:$0xff]
        %v442 = vld [vmem:[%s3 + $0x70] sm:$0xff]
        %v443 = vld [vmem:[%s3 + $0x78] sm:$0xff]
        %v444 = vld [vmem:[%s3 + $0x80] sm:$0xff]
        %v445 = vld [vmem:[%s3 + $0x88] sm:$0xff]
        %v446 = vld [vmem:[%s3 + $0x90] sm:$0xff]
        %v447 = vld [vmem:[%s3 + $0x98] sm:$0xff]
        %v448 = vld [vmem:[%s3 + $0xa0] sm:$0xff]
        %v449 = vld [vmem:[%s3 + $0xa8] sm:$0xff]
        %v450 = vld [vmem:[%s3 + $0xb0] sm:$0xff]
        %v451 = vld [vmem:[%s3 + $0xb8] sm:$0xff]
        %v452 = vld [vmem:[%s3 + $0xc0] sm:$0xff]
        %v453 = vld [vmem:[%s3 + $0xc8] sm:$0xff]
        %v454 = vld [vmem:[%s3 + $0xd0] sm:$0xff]
        %v455 = vld [vmem:[%s3 + $0xd8] sm:$0xff]
        %v456 = vld [vmem:[%s3 + $0xe0] sm:$0xff]
        %v457 = vld [vmem:[%s3 + $0xe8] sm:$0xff]
        %v458 = vld [vmem:[%s3 + $0xf0] sm:$0xff]
        %v459 = vld [vmem:[%s3 + $0xf8] sm:$0xff]
        %v460 = vld [vmem:[%s3 + $0x100] sm:$0xff]
        %v461 = vld [vmem:[%s3 + $0x108] sm:$0xff]
        %v462 = vld [vmem:[%s3 + $0x110] sm:$0xff]
        %v463 = vld [vmem:[%s3 + $0x118] sm:$0xff]
        %v464 = vld [vmem:[%s3 + $0x120] sm:$0xff]
        %v465 = vld [vmem:[%s3 + $0x128] sm:$0xff]
        %v466 = vld [vmem:[%s3 + $0x130] sm:$0xff]
        %v467 = vld [vmem:[%s3 + $0x138] sm:$0xff]
        %v468 = vld [vmem:[%s3 + $0x140] sm:$0xff]
        %v469 = vld [vmem:[%s3 + $0x148] sm:$0xff]
        %v470 = vld [vmem:[%s3 + $0x150] sm:$0xff]
        %v471 = vld [vmem:[%s3 + $0x158] sm:$0xff]
        %v472 = vld [vmem:[%s3 + $0x160] sm:$0xff]
        %v473 = vld [vmem:[%s3 + $0x168] sm:$0xff]
        %v474 = vld [vmem:[%s3 + $0x170] sm:$0xff]
        %v475 = vld [vmem:[%s3 + $0x178] sm:$0xff]
        %v476 = vld [vmem:[%s4] sm:$0x7]
        %v478 = vlaneseq
        %v479 = vshrl.u32 %v478, 7
        %v480 = vsub.s32 0, %v479
        %v481 = vrot.slane %v476, %v480
        %v482 = vlaneseq
        %v483 = vshrl.u32 %v482, 7
        %v484 = vsub.s32 1, %v483
        %v485 = vrot.slane %v476, %v484
        %v486 = vlaneseq
        %v487 = vshrl.u32 %v486, 7
        %v488 = vsub.s32 2, %v487
        %v489 = vrot.slane %v476, %v488
        %493 = vmatprep.subr.mxu0 %v429
        %494 = vmatpush1.msra.mxu0 %v428
        %495 = vmatprep.subr.mxu0 %v432
        %496 = vmatpush1.msra.mxu0 %v431
        %497 = vmatprep.subr.mxu0 %v435
        %498 = vmatpush1.msra.mxu0 %v434
        %499 = vmatprep.subr.mxu0 %v438
        %500 = vmatpush1.msra.mxu0 %v437
        %501 = vmatprep.subr.mxu0 %v441
        %502 = vmatpush1.msra.mxu0 %v440
        %503 = vmatprep.subr.mxu0 %v444
        %504 = vmatpush1.msra.mxu0 %v443
        %505 = vmatprep.subr.mxu0 %v447
        %506 = vmatpush1.msra.mxu0 %v446
        %507 = vmatprep.subr.mxu0 %v450
        %508 = vmatpush1.msra.mxu0 %v449
        %509 = vmatprep.subr.mxu0 %v453
        %510 = vmatpush1.msra.mxu0 %v452
        %511 = vmatprep.subr.mxu0 %v456
        %512 = vmatpush1.msra.mxu0 %v455
        %513 = vmatprep.subr.mxu0 %v459
        %514 = vmatpush1.msra.mxu0 %v458
        %515 = vmatprep.subr.mxu0 %v462
        %516 = vmatpush1.msra.mxu0 %v461
        %517 = vmatprep.subr.mxu0 %v465
        %518 = vmatpush1.msra.mxu0 %v464
        %519 = vmatprep.subr.mxu0 %v468
        %520 = vmatpush1.msra.mxu0 %v467
        %521 = vmatprep.subr.mxu0 %v471
        %522 = vmatpush1.msra.mxu0 %v470
        %523 = vmatprep.subr.mxu0 %v474
        %524 = vmatpush1.msra.mxu0 %v473
        %525 = vmatprep.subr.mxu0 0.0
        %526 = vmatpush1.msra.mxu0 0.0
        %527 = vmatprep.subr.mxu0 0.0
        %528 = vmatpush1.msra.mxu0 0.0
        %529 = vmatprep.subr.mxu0 0.0
        %530 = vmatpush1.msra.mxu0 0.0
        %531 = vmatprep.subr.mxu0 0.0
        %532 = vmatpush1.msra.mxu0 0.0
        %533 = vmatprep.subr.mxu0 0.0
        %534 = vmatpush1.msra.mxu0 0.0
        %535 = vmatprep.subr.mxu0 0.0
        %536 = vmatpush1.msra.mxu0 0.0
        %537 = vmatprep.subr.mxu0 0.0
        %538 = vmatpush1.msra.mxu0 0.0
        %539 = vmatprep.subr.mxu0 0.0
        %540 = vmatpush1.msra.mxu0 0.0
        %541 = vmatprep.subr.mxu0 0.0
        %542 = vmatpush1.msra.mxu0 0.0
        %543 = vmatprep.subr.mxu0 0.0
        %544 = vmatpush1.msra.mxu0 0.0
        %545 = vmatprep.subr.mxu0 0.0
        %546 = vmatpush1.msra.mxu0 0.0
        %547 = vmatprep.subr.mxu0 0.0
        %548 = vmatpush1.msra.mxu0 0.0
        %549 = vmatprep.subr.mxu0 0.0
        %550 = vmatpush1.msra.mxu0 0.0
        %551 = vmatprep.subr.mxu0 0.0
        %552 = vmatpush1.msra.mxu0 0.0
        %553 = vmatprep.subr.mxu0 0.0
        %554 = vmatpush1.msra.mxu0 0.0
        %555 = vmatprep.subr.mxu0 0.0
        %556 = vmatpush1.msra.mxu0 0.0
        %557 = vmatprep.mubr.f32.mxu0 0.0
        %558 = vmatmul.mubr.f32.gmra.mrb[0].mxu0 %v426
        %v559 = vpop.f32.mrb[0].mxu0
        %v560 = vadd.f32 %v481, %v559
        %v561 = vpop.f32.mrb[0].mxu0
        %v562 = vadd.f32 %v485, %v561
        %563 = vmatprep.mubr.f32.mxu0 0.0
        %564 = vmatmul.mubr.f32.gmra.mrb[0].mxu0 %v427
        %v565 = vpop.f32.mrb[0].mxu0
        %v566 = vadd.f32 %v481, %v565
        %v567 = vpop.f32.mrb[0].mxu0
        %v568 = vadd.f32 %v485, %v567
        %569 = vdwg.mxu0
        %570 = vmatprep.subr.mxu0 0.0
        %571 = vmatpush1.msra.mxu0 %v430
        %572 = vmatprep.subr.mxu0 0.0
        %573 = vmatpush1.msra.mxu0 %v433
        %574 = vmatprep.subr.mxu0 0.0
        %575 = vmatpush1.msra.mxu0 %v436
        %576 = vmatprep.subr.mxu0 0.0
        %577 = vmatpush1.msra.mxu0 %v439
        %578 = vmatprep.subr.mxu0 0.0
        %579 = vmatpush1.msra.mxu0 %v442
        %580 = vmatprep.subr.mxu0 0.0
        %581 = vmatpush1.msra.mxu0 %v445
        %582 = vmatprep.subr.mxu0 0.0
        %583 = vmatpush1.msra.mxu0 %v448
        %584 = vmatprep.subr.mxu0 0.0
        %585 = vmatpush1.msra.mxu0 %v451
        %586 = vmatprep.subr.mxu0 0.0
        %587 = vmatpush1.msra.mxu0 %v454
        %588 = vmatprep.subr.mxu0 0.0
        %589 = vmatpush1.msra.mxu0 %v457
        %590 = vmatprep.subr.mxu0 0.0
        %591 = vmatpush1.msra.mxu0 %v460
        %592 = vmatprep.subr.mxu0 0.0
        %593 = vmatpush1.msra.mxu0 %v463
        %594 = vmatprep.subr.mxu0 0.0
        %595 = vmatpush1.msra.mxu0 %v466
        %596 = vmatprep.subr.mxu0 0.0
        %597 = vmatpush1.msra.mxu0 %v469
        %598 = vmatprep.subr.mxu0 0.0
        %599 = vmatpush1.msra.mxu0 %v472
        %600 = vmatprep.subr.mxu0 0.0
        %601 = vmatpush1.msra.mxu0 %v475
        %602 = vmatprep.subr.mxu0 0.0
        %603 = vmatpush1.msra.mxu0 0.0
        %604 = vmatprep.subr.mxu0 0.0
        %605 = vmatpush1.msra.mxu0 0.0
        %606 = vmatprep.subr.mxu0 0.0
        %607 = vmatpush1.msra.mxu0 0.0
        %608 = vmatprep.subr.mxu0 0.0
        %609 = vmatpush1.msra.mxu0 0.0
        %610 = vmatprep.subr.mxu0 0.0
        %611 = vmatpush1.msra.mxu0 0.0
        %612 = vmatprep.subr.mxu0 0.0
        %613 = vmatpush1.msra.mxu0 0.0
        %614 = vmatprep.subr.mxu0 0.0
        %615 = vmatpush1.msra.mxu0 0.0
        %616 = vmatprep.subr.mxu0 0.0
        %617 = vmatpush1.msra.mxu0 0.0
        %618 = vmatprep.subr.mxu0 0.0
        %619 = vmatpush1.msra.mxu0 0.0
        %620 = vmatprep.subr.mxu0 0.0
        %621 = vmatpush1.msra.mxu0 0.0
        %622 = vmatprep.subr.mxu0 0.0
        %623 = vmatpush1.msra.mxu0 0.0
        %624 = vmatprep.subr.mxu0 0.0
        %625 = vmatpush1.msra.mxu0 0.0
        %626 = vmatprep.subr.mxu0 0.0
        %627 = vmatpush1.msra.mxu0 0.0
        %628 = vmatprep.subr.mxu0 0.0
        %629 = vmatpush1.msra.mxu0 0.0
        %630 = vmatprep.subr.mxu0 0.0
        %631 = vmatpush1.msra.mxu0 0.0
        %632 = vmatprep.subr.mxu0 0.0
        %633 = vmatpush1.msra.mxu0 0.0
        %634 = vmatprep.mubr.f32.mxu0 0.0
        %635 = vmatmul.mubr.f32.gmra.mrb[0].mxu0 %v426
        %v636 = vpop.f32.mrb[0].mxu0
        %v637 = vadd.f32 %v489, %v636
        %v638 = vpop.f32.mrb[0].mxu0
        %639 = vmatprep.mubr.f32.mxu0 0.0
        %640 = vmatmul.mubr.f32.gmra.mrb[0].mxu0 %v427
        %v641 = vpop.f32.mrb[0].mxu0
        %v642 = vadd.f32 %v489, %v641
        %v643 = vpop.f32.mrb[0].mxu0
        %644 = vdwg.mxu0
        %v645 = vmax.f32 %v560, 0.0
        %v646 = vmax.f32 %v562, 0.0
        %v647 = vmax.f32 %v637, 0.0
        %v648 = vmax.f32 %v566, 0.0
        %v649 = vmax.f32 %v568, 0.0
        %v650 = vmax.f32 %v642, 0.0
        %v651 = vld [vmem:[%s5] sm:$0xff]
        %v652 = vld [vmem:[%s5 + $0x8] sm:$0xff]
        %v653 = vld [vmem:[%s5 + $0x10] sm:$0xff]
        %v654 = vld [vmem:[%s5 + $0x18] sm:$0xff]
        %v655 = vld [vmem:[%s5 + $0x20] sm:$0xff]
        %v656 = vld [vmem:[%s5 + $0x28] sm:$0xff]
        %v657 = vld [vmem:[%s5 + $0x30] sm:$0xff]
        %v658 = vld [vmem:[%s5 + $0x38] sm:$0xff]
        %v659 = vld [vmem:[%s5 + $0x40] sm:$0xff]
        %v660 = vld [vmem:[%s5 + $0x48] sm:$0xff]
        %v661 = vld [vmem:[%s5 + $0x50] sm:$0xff]
        %v662 = vld [vmem:[%s5 + $0x58] sm:$0xff]
        %v663 = vld [vmem:[%s5 + $0x60] sm:$0xff]
        %v664 = vld [vmem:[%s5 + $0x68] sm:$0xff]
        %v665 = vld [vmem:[%s5 + $0x70] sm:$0xff]
        %v666 = vld [vmem:[%s5 + $0x78] sm:$0xff]
        %v667 = vld [vmem:[%s5 + $0x80] sm:$0xff]
        %v668 = vld [vmem:[%s5 + $0x88] sm:$0xff]
        %v669 = vld [vmem:[%s5 + $0x90] sm:$0xff]
        %v670 = vld [vmem:[%s5 + $0x98] sm:$0xff]
        %v671 = vld [vmem:[%s5 + $0xa0] sm:$0xff]
        %v672 = vld [vmem:[%s5 + $0xa8] sm:$0xff]
        %v673 = vld [vmem:[%s5 + $0xb0] sm:$0xff]
        %v674 = vld [vmem:[%s5 + $0xb8] sm:$0xff]
        %v675 = vld [vmem:[%s5 + $0xc0] sm:$0xff]
        %v676 = vld [vmem:[%s5 + $0xc8] sm:$0xff]
        %v677 = vld [vmem:[%s5 + $0xd0] sm:$0xff]
        %v678 = vld [vmem:[%s5 + $0xd8] sm:$0xff]
        %v679 = vld [vmem:[%s5 + $0xe0] sm:$0xff]
        %v680 = vld [vmem:[%s5 + $0xe8] sm:$0xff]
        %v681 = vld [vmem:[%s5 + $0xf0] sm:$0xff]
        %v682 = vld [vmem:[%s5 + $0xf8] sm:$0xff]
        %v683 = vld [vmem:[%s5 + $0x100] sm:$0xff]
        %v684 = vld [vmem:[%s5 + $0x108] sm:$0xff]
        %v685 = vld [vmem:[%s5 + $0x110] sm:$0xff]
        %v686 = vld [vmem:[%s5 + $0x118] sm:$0xff]
        %v687 = vld [vmem:[%s5 + $0x120] sm:$0xff]
        %v688 = vld [vmem:[%s5 + $0x128] sm:$0xff]
        %v689 = vld [vmem:[%s5 + $0x130] sm:$0xff]
        %v690 = vld [vmem:[%s5 + $0x138] sm:$0xff]
        %v691 = vld [vmem:[%s5 + $0x140] sm:$0xff]
        %v692 = vld [vmem:[%s5 + $0x148] sm:$0xff]
        %v693 = vld [vmem:[%s5 + $0x150] sm:$0xff]
        %v694 = vld [vmem:[%s5 + $0x158] sm:$0xff]
        %v695 = vld [vmem:[%s5 + $0x160] sm:$0xff]
        %v696 = vld [vmem:[%s5 + $0x168] sm:$0xff]
        %v697 = vld [vmem:[%s5 + $0x170] sm:$0xff]
        %v698 = vld [vmem:[%s5 + $0x178] sm:$0xff]
        %v699 = vld [vmem:[%s5 + $0x180] sm:$0xff]
        %v700 = vld [vmem:[%s5 + $0x188] sm:$0xff]
        %v701 = vld [vmem:[%s5 + $0x190] sm:$0xff]
        %v702 = vld [vmem:[%s5 + $0x198] sm:$0xff]
        %v703 = vld [vmem:[%s5 + $0x1a0] sm:$0xff]
        %v704 = vld [vmem:[%s5 + $0x1a8] sm:$0xff]
        %v705 = vld [vmem:[%s5 + $0x1b0] sm:$0xff]
        %v706 = vld [vmem:[%s5 + $0x1b8] sm:$0xff]
        %v707 = vld [vmem:[%s5 + $0x1c0] sm:$0xff]
        %v708 = vld [vmem:[%s5 + $0x1c8] sm:$0xff]
        %v709 = vld [vmem:[%s5 + $0x1d0] sm:$0xff]
        %v710 = vld [vmem:[%s5 + $0x1d8] sm:$0xff]
        %v711 = vld [vmem:[%s5 + $0x1e0] sm:$0xff]
        %v712 = vld [vmem:[%s5 + $0x1e8] sm:$0xff]
        %v713 = vld [vmem:[%s5 + $0x1f0] sm:$0xff]
        %v714 = vld [vmem:[%s5 + $0x1f8] sm:$0xff]
        %v715 = vld [vmem:[%s5 + $0x200] sm:$0xff]
        %v716 = vld [vmem:[%s5 + $0x208] sm:$0xff]
        %v717 = vld [vmem:[%s5 + $0x210] sm:$0xff]
        %v718 = vld [vmem:[%s5 + $0x218] sm:$0xff]
        %v719 = vld [vmem:[%s5 + $0x220] sm:$0xff]
        %v720 = vld [vmem:[%s5 + $0x228] sm:$0xff]
        %v721 = vld [vmem:[%s5 + $0x230] sm:$0xff]
        %v722 = vld [vmem:[%s5 + $0x238] sm:$0xff]
        %v723 = vld [vmem:[%s5 + $0x240] sm:$0xff]
        %v724 = vld [vmem:[%s5 + $0x248] sm:$0xff]
        %v725 = vld [vmem:[%s5 + $0x250] sm:$0xff]
        %v726 = vld [vmem:[%s5 + $0x258] sm:$0xff]
        %v727 = vld [vmem:[%s5 + $0x260] sm:$0xff]
        %v728 = vld [vmem:[%s5 + $0x268] sm:$0xff]
        %v729 = vld [vmem:[%s5 + $0x270] sm:$0xff]
        %v730 = vld [vmem:[%s5 + $0x278] sm:$0xff]
        %v731 = vld [vmem:[%s5 + $0x280] sm:$0xff]
        %v732 = vld [vmem:[%s5 + $0x288] sm:$0xff]
        %v733 = vld [vmem:[%s5 + $0x290] sm:$0xff]
        %v734 = vld [vmem:[%s5 + $0x298] sm:$0xff]
        %v735 = vld [vmem:[%s5 + $0x2a0] sm:$0xff]
        %v736 = vld [vmem:[%s5 + $0x2a8] sm:$0xff]
        %v737 = vld [vmem:[%s5 + $0x2b0] sm:$0xff]
        %v738 = vld [vmem:[%s5 + $0x2b8] sm:$0xff]
        %v739 = vld [vmem:[%s5 + $0x2c0] sm:$0xff]
        %v740 = vld [vmem:[%s5 + $0x2c8] sm:$0xff]
        %v741 = vld [vmem:[%s5 + $0x2d0] sm:$0xff]
        %v742 = vld [vmem:[%s5 + $0x2d8] sm:$0xff]
        %v743 = vld [vmem:[%s5 + $0x2e0] sm:$0xff]
        %v744 = vld [vmem:[%s5 + $0x2e8] sm:$0xff]
        %v745 = vld [vmem:[%s5 + $0x2f0] sm:$0xff]
        %v746 = vld [vmem:[%s5 + $0x2f8] sm:$0xff]
        %v747 = vld [vmem:[%s5 + $0x300] sm:$0xff]
        %v748 = vld [vmem:[%s5 + $0x308] sm:$0xff]
        %v749 = vld [vmem:[%s5 + $0x310] sm:$0xff]
        %v750 = vld [vmem:[%s5 + $0x318] sm:$0xff]
        %v751 = vld [vmem:[%s5 + $0x320] sm:$0xff]
        %v752 = vld [vmem:[%s5 + $0x328] sm:$0xff]
        %v753 = vld [vmem:[%s5 + $0x330] sm:$0xff]
        %v754 = vld [vmem:[%s5 + $0x338] sm:$0xff]
        %v755 = vld [vmem:[%s5 + $0x340] sm:$0xff]
        %v756 = vld [vmem:[%s5 + $0x348] sm:$0xff]
        %v757 = vld [vmem:[%s5 + $0x350] sm:$0xff]
        %v758 = vld [vmem:[%s5 + $0x358] sm:$0xff]
        %v759 = vld [vmem:[%s5 + $0x360] sm:$0xff]
        %v760 = vld [vmem:[%s5 + $0x368] sm:$0xff]
        %v761 = vld [vmem:[%s5 + $0x370] sm:$0xff]
        %v762 = vld [vmem:[%s5 + $0x378] sm:$0xff]
        %v763 = vld [vmem:[%s5 + $0x380] sm:$0xff]
        %v764 = vld [vmem:[%s5 + $0x388] sm:$0xff]
        %v765 = vld [vmem:[%s5 + $0x390] sm:$0xff]
        %v766 = vld [vmem:[%s5 + $0x398] sm:$0xff]
        %v767 = vld [vmem:[%s5 + $0x3a0] sm:$0xff]
        %v768 = vld [vmem:[%s5 + $0x3a8] sm:$0xff]
        %v769 = vld [vmem:[%s5 + $0x3b0] sm:$0xff]
        %v770 = vld [vmem:[%s5 + $0x3b8] sm:$0xff]
        %v771 = vld [vmem:[%s5 + $0x3c0] sm:$0xff]
        %v772 = vld [vmem:[%s5 + $0x3c8] sm:$0xff]
        %v773 = vld [vmem:[%s5 + $0x3d0] sm:$0xff]
        %v774 = vld [vmem:[%s5 + $0x3d8] sm:$0xff]
        %v775 = vld [vmem:[%s5 + $0x3e0] sm:$0xff]
        %v776 = vld [vmem:[%s5 + $0x3e8] sm:$0xff]
        %v777 = vld [vmem:[%s5 + $0x3f0] sm:$0xff]
        %v778 = vld [vmem:[%s5 + $0x3f8] sm:$0xff]
        %v779 = vld [vmem:[%s5 + $0x400] sm:$0xff]
        %v780 = vld [vmem:[%s5 + $0x408] sm:$0xff]
        %v781 = vld [vmem:[%s5 + $0x410] sm:$0xff]
        %v782 = vld [vmem:[%s5 + $0x418] sm:$0xff]
        %v783 = vld [vmem:[%s5 + $0x420] sm:$0xff]
        %v784 = vld [vmem:[%s5 + $0x428] sm:$0xff]
        %v785 = vld [vmem:[%s5 + $0x430] sm:$0xff]
        %v786 = vld [vmem:[%s5 + $0x438] sm:$0xff]
        %v787 = vld [vmem:[%s5 + $0x440] sm:$0xff]
        %v788 = vld [vmem:[%s5 + $0x448] sm:$0xff]
        %v789 = vld [vmem:[%s5 + $0x450] sm:$0xff]
        %v790 = vld [vmem:[%s5 + $0x458] sm:$0xff]
        %v791 = vld [vmem:[%s5 + $0x460] sm:$0xff]
        %v792 = vld [vmem:[%s5 + $0x468] sm:$0xff]
        %v793 = vld [vmem:[%s5 + $0x470] sm:$0xff]
        %v794 = vld [vmem:[%s5 + $0x478] sm:$0xff]
        %v795 = vld [vmem:[%s6] sm:$0xf]
        %v797 = vlaneseq
        %v798 = vshrl.u32 %v797, 7
        %v799 = vsub.s32 0, %v798
        %v800 = vrot.slane %v795, %v799
        %v801 = vlaneseq
        %v802 = vshrl.u32 %v801, 7
        %v803 = vsub.s32 1, %v802
        %v804 = vrot.slane %v795, %v803
        %v805 = vlaneseq
        %v806 = vshrl.u32 %v805, 7
        %v807 = vsub.s32 2, %v806
        %v808 = vrot.slane %v795, %v807
        %v809 = vlaneseq
        %v810 = vshrl.u32 %v809, 7
        %v811 = vsub.s32 3, %v810
        %v812 = vrot.slane %v795, %v811
        %vm817 = vcmask 261120
        %v819 = vsel %vm817, %v647, 0
        %v822 = vsel %vm817, %v650, 0
        %824 = vmatprep.subr.mxu0 %v652
        %825 = vmatpush1.msra.mxu0 %v651
        %826 = vmatprep.subr.mxu0 %v656
        %827 = vmatpush1.msra.mxu0 %v655
        %828 = vmatprep.subr.mxu0 %v660
        %829 = vmatpush1.msra.mxu0 %v659
        %830 = vmatprep.subr.mxu0 %v664
        %831 = vmatpush1.msra.mxu0 %v663
        %832 = vmatprep.subr.mxu0 %v668
        %833 = vmatpush1.msra.mxu0 %v667
        %834 = vmatprep.subr.mxu0 %v672
        %835 = vmatpush1.msra.mxu0 %v671
        %836 = vmatprep.subr.mxu0 %v676
        %837 = vmatpush1.msra.mxu0 %v675
        %838 = vmatprep.subr.mxu0 %v680
        %839 = vmatpush1.msra.mxu0 %v679
        %840 = vmatprep.subr.mxu0 %v684
        %841 = vmatpush1.msra.mxu0 %v683
        %842 = vmatprep.subr.mxu0 %v688
        %843 = vmatpush1.msra.mxu0 %v687
        %844 = vmatprep.subr.mxu0 %v692
        %845 = vmatpush1.msra.mxu0 %v691
        %846 = vmatprep.subr.mxu0 %v696
        %847 = vmatpush1.msra.mxu0 %v695
        %848 = vmatprep.subr.mxu0 %v700
        %849 = vmatpush1.msra.mxu0 %v699
        %850 = vmatprep.subr.mxu0 %v704
        %851 = vmatpush1.msra.mxu0 %v703
        %852 = vmatprep.subr.mxu0 %v708
        %853 = vmatpush1.msra.mxu0 %v707
        %854 = vmatprep.subr.mxu0 %v712
        %855 = vmatpush1.msra.mxu0 %v711
        %856 = vmatprep.subr.mxu0 %v716
        %857 = vmatpush1.msra.mxu0 %v715
        %858 = vmatprep.subr.mxu0 %v720
        %859 = vmatpush1.msra.mxu0 %v719
        %860 = vmatprep.subr.mxu0 %v724
        %861 = vmatpush1.msra.mxu0 %v723
        %862 = vmatprep.subr.mxu0 %v728
        %863 = vmatpush1.msra.mxu0 %v727
        %864 = vmatprep.subr.mxu0 %v732
        %865 = vmatpush1.msra.mxu0 %v731
        %866 = vmatprep.subr.mxu0 %v736
        %867 = vmatpush1.msra.mxu0 %v735
        %868 = vmatprep.subr.mxu0 %v740
        %869 = vmatpush1.msra.mxu0 %v739
        %870 = vmatprep.subr.mxu0 %v744
        %871 = vmatpush1.msra.mxu0 %v743
        %872 = vmatprep.subr.mxu0 %v748
        %873 = vmatpush1.msra.mxu0 %v747
        %874 = vmatprep.subr.mxu0 %v752
        %875 = vmatpush1.msra.mxu0 %v751
        %876 = vmatprep.subr.mxu0 %v756
        %877 = vmatpush1.msra.mxu0 %v755
        %878 = vmatprep.subr.mxu0 %v760
        %879 = vmatpush1.msra.mxu0 %v759
        %880 = vmatprep.subr.mxu0 %v764
        %881 = vmatpush1.msra.mxu0 %v763
        %882 = vmatprep.subr.mxu0 %v768
        %883 = vmatpush1.msra.mxu0 %v767
        %884 = vmatprep.subr.mxu0 %v772
        %885 = vmatpush1.msra.mxu0 %v771
        %886 = vmatprep.subr.mxu0 %v776
        %887 = vmatpush1.msra.mxu0 %v775
        %888 = vmatprep.mubr.f32.mxu0 %v646
        %889 = vmatmul.mubr.f32.gmra.mrb[0].mxu0 %v645
        %v890 = vpop.f32.mrb[0].mxu0
        %v891 = vadd.f32 %v800, %v890
        %v892 = vpop.f32.mrb[0].mxu0
        %v893 = vadd.f32 %v804, %v892
        %894 = vmatprep.mubr.f32.mxu0 %v649
        %895 = vmatmul.mubr.f32.gmra.mrb[0].mxu0 %v648
        %v896 = vpop.f32.mrb[0].mxu0
        %v897 = vadd.f32 %v800, %v896
        %v898 = vpop.f32.mrb[0].mxu0
        %v899 = vadd.f32 %v804, %v898
        %900 = vdwg.mxu0
        %901 = vmatprep.subr.mxu0 %v780
        %902 = vmatpush1.msra.mxu0 %v779
        %903 = vmatprep.subr.mxu0 %v784
        %904 = vmatpush1.msra.mxu0 %v783
        %905 = vmatprep.subr.mxu0 %v788
        %906 = vmatpush1.msra.mxu0 %v787
        %907 = vmatprep.subr.mxu0 %v792
        %908 = vmatpush1.msra.mxu0 %v791
        %909 = vmatprep.subr.mxu0 0.0
        %910 = vmatpush1.msra.mxu0 0.0
        %911 = vmatprep.subr.mxu0 0.0
        %912 = vmatpush1.msra.mxu0 0.0
        %913 = vmatprep.subr.mxu0 0.0
        %914 = vmatpush1.msra.mxu0 0.0
        %915 = vmatprep.subr.mxu0 0.0
        %916 = vmatpush1.msra.mxu0 0.0
        %917 = vmatprep.subr.mxu0 0.0
        %918 = vmatpush1.msra.mxu0 0.0
        %919 = vmatprep.subr.mxu0 0.0
        %920 = vmatpush1.msra.mxu0 0.0
        %921 = vmatprep.subr.mxu0 0.0
        %922 = vmatpush1.msra.mxu0 0.0
        %923 = vmatprep.subr.mxu0 0.0
        %924 = vmatpush1.msra.mxu0 0.0
        %925 = vmatprep.subr.mxu0 0.0
        %926 = vmatpush1.msra.mxu0 0.0
        %927 = vmatprep.subr.mxu0 0.0
        %928 = vmatpush1.msra.mxu0 0.0
        %929 = vmatprep.subr.mxu0 0.0
        %930 = vmatpush1.msra.mxu0 0.0
        %931 = vmatprep.subr.mxu0 0.0
        %932 = vmatpush1.msra.mxu0 0.0
        %933 = vmatprep.subr.mxu0 0.0
        %934 = vmatpush1.msra.mxu0 0.0
        %935 = vmatprep.subr.mxu0 0.0
        %936 = vmatpush1.msra.mxu0 0.0
        %937 = vmatprep.subr.mxu0 0.0
        %938 = vmatpush1.msra.mxu0 0.0
        %939 = vmatprep.subr.mxu0 0.0
        %940 = vmatpush1.msra.mxu0 0.0
        %941 = vmatprep.subr.mxu0 0.0
        %942 = vmatpush1.msra.mxu0 0.0
        %943 = vmatprep.subr.mxu0 0.0
        %944 = vmatpush1.msra.mxu0 0.0
        %945 = vmatprep.subr.mxu0 0.0
        %946 = vmatpush1.msra.mxu0 0.0
        %947 = vmatprep.subr.mxu0 0.0
        %948 = vmatpush1.msra.mxu0 0.0
        %949 = vmatprep.subr.mxu0 0.0
        %950 = vmatpush1.msra.mxu0 0.0
        %951 = vmatprep.subr.mxu0 0.0
        %952 = vmatpush1.msra.mxu0 0.0
        %953 = vmatprep.subr.mxu0 0.0
        %954 = vmatpush1.msra.mxu0 0.0
        %955 = vmatprep.subr.mxu0 0.0
        %956 = vmatpush1.msra.mxu0 0.0
        %957 = vmatprep.subr.mxu0 0.0
        %958 = vmatpush1.msra.mxu0 0.0
        %959 = vmatprep.subr.mxu0 0.0
        %960 = vmatpush1.msra.mxu0 0.0
        %961 = vmatprep.subr.mxu0 0.0
        %962 = vmatpush1.msra.mxu0 0.0
        %963 = vmatprep.subr.mxu0 0.0
        %964 = vmatpush1.msra.mxu0 0.0
        %965 = vmatprep.mubr.f32.mxu0 0.0
        %966 = vmatmul.mubr.f32.gmra.mrb[0].mxu0 %v819
        %v967 = vpop.f32.mrb[0].mxu0
        %v968 = vadd.f32 %v891, %v967
        %v969 = vpop.f32.mrb[0].mxu0
        %v970 = vadd.f32 %v893, %v969
        %971 = vmatprep.mubr.f32.mxu0 0.0
        %972 = vmatmul.mubr.f32.gmra.mrb[0].mxu0 %v822
        %v973 = vpop.f32.mrb[0].mxu0
        %v974 = vadd.f32 %v897, %v973
        %v975 = vpop.f32.mrb[0].mxu0
        %v976 = vadd.f32 %v899, %v975
        %977 = vdwg.mxu0
        %978 = vmatprep.subr.mxu0 %v654
        %979 = vmatpush1.msra.mxu0 %v653
        %980 = vmatprep.subr.mxu0 %v658
        %981 = vmatpush1.msra.mxu0 %v657
        %982 = vmatprep.subr.mxu0 %v662
        %983 = vmatpush1.msra.mxu0 %v661
        %984 = vmatprep.subr.mxu0 %v666
        %985 = vmatpush1.msra.mxu0 %v665
        %986 = vmatprep.subr.mxu0 %v670
        %987 = vmatpush1.msra.mxu0 %v669
        %988 = vmatprep.subr.mxu0 %v674
        %989 = vmatpush1.msra.mxu0 %v673
        %990 = vmatprep.subr.mxu0 %v678
        %991 = vmatpush1.msra.mxu0 %v677
        %992 = vmatprep.subr.mxu0 %v682
        %993 = vmatpush1.msra.mxu0 %v681
        %994 = vmatprep.subr.mxu0 %v686
        %995 = vmatpush1.msra.mxu0 %v685
        %996 = vmatprep.subr.mxu0 %v690
        %997 = vmatpush1.msra.mxu0 %v689
        %998 = vmatprep.subr.mxu0 %v694
        %999 = vmatpush1.msra.mxu0 %v693
        %1000 = vmatprep.subr.mxu0 %v698
        %1001 = vmatpush1.msra.mxu0 %v697
        %1002 = vmatprep.subr.mxu0 %v702
        %1003 = vmatpush1.msra.mxu0 %v701
        %1004 = vmatprep.subr.mxu0 %v706
        %1005 = vmatpush1.msra.mxu0 %v705
        %1006 = vmatprep.subr.mxu0 %v710
        %1007 = vmatpush1.msra.mxu0 %v709
        %1008 = vmatprep.subr.mxu0 %v714
        %1009 = vmatpush1.msra.mxu0 %v713
        %1010 = vmatprep.subr.mxu0 %v718
        %1011 = vmatpush1.msra.mxu0 %v717
        %1012 = vmatprep.subr.mxu0 %v722
        %1013 = vmatpush1.msra.mxu0 %v721
        %1014 = vmatprep.subr.mxu0 %v726
        %1015 = vmatpush1.msra.mxu0 %v725
        %1016 = vmatprep.subr.mxu0 %v730
        %1017 = vmatpush1.msra.mxu0 %v729
        %1018 = vmatprep.subr.mxu0 %v734
        %1019 = vmatpush1.msra.mxu0 %v733
        %1020 = vmatprep.subr.mxu0 %v738
        %1021 = vmatpush1.msra.mxu0 %v737
        %1022 = vmatprep.subr.mxu0 %v742
        %1023 = vmatpush1.msra.mxu0 %v741
        %1024 = vmatprep.subr.mxu0 %v746
        %1025 = vmatpush1.msra.mxu0 %v745
        %1026 = vmatprep.subr.mxu0 %v750
        %1027 = vmatpush1.msra.mxu0 %v749
        %1028 = vmatprep.subr.mxu0 %v754
        %1029 = vmatpush1.msra.mxu0 %v753
        %1030 = vmatprep.subr.mxu0 %v758
        %1031 = vmatpush1.msra.mxu0 %v757
        %1032 = vmatprep.subr.mxu0 %v762
        %1033 = vmatpush1.msra.mxu0 %v761
        %1034 = vmatprep.subr.mxu0 %v766
        %1035 = vmatpush1.msra.mxu0 %v765
        %1036 = vmatprep.subr.mxu0 %v770
        %1037 = vmatpush1.msra.mxu0 %v769
        %1038 = vmatprep.subr.mxu0 %v774
        %1039 = vmatpush1.msra.mxu0 %v773
        %1040 = vmatprep.subr.mxu0 %v778
        %1041 = vmatpush1.msra.mxu0 %v777
        %1042 = vmatprep.mubr.f32.mxu0 %v646
        %1043 = vmatmul.mubr.f32.gmra.mrb[0].mxu0 %v645
        %v1044 = vpop.f32.mrb[0].mxu0
        %v1045 = vadd.f32 %v808, %v1044
        %v1046 = vpop.f32.mrb[0].mxu0
        %v1047 = vadd.f32 %v812, %v1046
        %1048 = vmatprep.mubr.f32.mxu0 %v649
        %1049 = vmatmul.mubr.f32.gmra.mrb[0].mxu0 %v648
        %v1050 = vpop.f32.mrb[0].mxu0
        %v1051 = vadd.f32 %v808, %v1050
        %v1052 = vpop.f32.mrb[0].mxu0
        %v1053 = vadd.f32 %v812, %v1052
        %1054 = vdwg.mxu0
        %1055 = vmatprep.subr.mxu0 %v782
        %1056 = vmatpush1.msra.mxu0 %v781
        %1057 = vmatprep.subr.mxu0 %v786
        %1058 = vmatpush1.msra.mxu0 %v785
        %1059 = vmatprep.subr.mxu0 %v790
        %1060 = vmatpush1.msra.mxu0 %v789
        %1061 = vmatprep.subr.mxu0 %v794
        %1062 = vmatpush1.msra.mxu0 %v793
        %1063 = vmatprep.subr.mxu0 0.0
        %1064 = vmatpush1.msra.mxu0 0.0
        %1065 = vmatprep.subr.mxu0 0.0
        %1066 = vmatpush1.msra.mxu0 0.0
        %1067 = vmatprep.subr.mxu0 0.0
        %1068 = vmatpush1.msra.mxu0 0.0
        %1069 = vmatprep.subr.mxu0 0.0
        %1070 = vmatpush1.msra.mxu0 0.0
        %1071 = vmatprep.subr.mxu0 0.0
        %1072 = vmatpush1.msra.mxu0 0.0
        %1073 = vmatprep.subr.mxu0 0.0
        %1074 = vmatpush1.msra.mxu0 0.0
        %1075 = vmatprep.subr.mxu0 0.0
        %1076 = vmatpush1.msra.mxu0 0.0
        %1077 = vmatprep.subr.mxu0 0.0
        %1078 = vmatpush1.msra.mxu0 0.0
        %1079 = vmatprep.subr.mxu0 0.0
        %1080 = vmatpush1.msra.mxu0 0.0
        %1081 = vmatprep.subr.mxu0 0.0
        %1082 = vmatpush1.msra.mxu0 0.0
        %1083 = vmatprep.subr.mxu0 0.0
        %1084 = vmatpush1.msra.mxu0 0.0
        %1085 = vmatprep.subr.mxu0 0.0
        %1086 = vmatpush1.msra.mxu0 0.0
        %1087 = vmatprep.subr.mxu0 0.0
        %1088 = vmatpush1.msra.mxu0 0.0
        %1089 = vmatprep.subr.mxu0 0.0
        %1090 = vmatpush1.msra.mxu0 0.0
        %1091 = vmatprep.subr.mxu0 0.0
        %1092 = vmatpush1.msra.mxu0 0.0
        %1093 = vmatprep.subr.mxu0 0.0
        %1094 = vmatpush1.msra.mxu0 0.0
        %1095 = vmatprep.subr.mxu0 0.0
        %1096 = vmatpush1.msra.mxu0 0.0
        %1097 = vmatprep.subr.mxu0 0.0
        %1098 = vmatpush1.msra.mxu0 0.0
        %1099 = vmatprep.subr.mxu0 0.0
        %1100 = vmatpush1.msra.mxu0 0.0
        %1101 = vmatprep.subr.mxu0 0.0
        %1102 = vmatpush1.msra.mxu0 0.0
        %1103 = vmatprep.subr.mxu0 0.0
        %1104 = vmatpush1.msra.mxu0 0.0
        %1105 = vmatprep.subr.mxu0 0.0
        %1106 = vmatpush1.msra.mxu0 0.0
        %1107 = vmatprep.subr.mxu0 0.0
        %1108 = vmatpush1.msra.mxu0 0.0
        %1109 = vmatprep.subr.mxu0 0.0
        %1110 = vmatpush1.msra.mxu0 0.0
        %1111 = vmatprep.subr.mxu0 0.0
        %1112 = vmatpush1.msra.mxu0 0.0
        %1113 = vmatprep.subr.mxu0 0.0
        %1114 = vmatpush1.msra.mxu0 0.0
        %1115 = vmatprep.subr.mxu0 0.0
        %1116 = vmatpush1.msra.mxu0 0.0
        %1117 = vmatprep.subr.mxu0 0.0
        %1118 = vmatpush1.msra.mxu0 0.0
        %1119 = vmatprep.mubr.f32.mxu0 0.0
        %1120 = vmatmul.mubr.f32.gmra.mrb[0].mxu0 %v819
        %v1121 = vpop.f32.mrb[0].mxu0
        %v1122 = vadd.f32 %v1045, %v1121
        %v1123 = vpop.f32.mrb[0].mxu0
        %v1124 = vadd.f32 %v1047, %v1123
        %1125 = vmatprep.mubr.f32.mxu0 0.0
        %1126 = vmatmul.mubr.f32.gmra.mrb[0].mxu0 %v822
        %v1127 = vpop.f32.mrb[0].mxu0
        %v1128 = vadd.f32 %v1051, %v1127
        %v1129 = vpop.f32.mrb[0].mxu0
        %v1130 = vadd.f32 %v1053, %v1129
        %1131 = vdwg.mxu0
        %v1132 = vmax.f32 %v968, 0.0
        %v1133 = vmax.f32 %v970, 0.0
        %v1134 = vmax.f32 %v1122, 0.0
        %v1135 = vmax.f32 %v1124, 0.0
        %v1136 = vmax.f32 %v974, 0.0
        %v1137 = vmax.f32 %v976, 0.0
        %v1138 = vmax.f32 %v1128, 0.0
        %v1139 = vmax.f32 %v1130, 0.0
        %v1140 = vld [vmem:[%s7] sm:$0xff]
        %v1141 = vld [vmem:[%s7 + $0x8] sm:$0xff]
        %v1142 = vld [vmem:[%s7 + $0x10] sm:$0xff]
        %v1143 = vld [vmem:[%s7 + $0x18] sm:$0xff]
        %v1144 = vld [vmem:[%s7 + $0x20] sm:$0xff]
        %v1145 = vld [vmem:[%s7 + $0x28] sm:$0xff]
        %v1146 = vld [vmem:[%s7 + $0x30] sm:$0xff]
        %v1147 = vld [vmem:[%s7 + $0x38] sm:$0xff]
        %v1148 = vld [vmem:[%s7 + $0x40] sm:$0xff]
        %v1149 = vld [vmem:[%s7 + $0x48] sm:$0xff]
        %v1150 = vld [vmem:[%s7 + $0x50] sm:$0xff]
        %v1151 = vld [vmem:[%s7 + $0x58] sm:$0xff]
        %v1152 = vld [vmem:[%s7 + $0x60] sm:$0xff]
        %v1153 = vld [vmem:[%s7 + $0x68] sm:$0xff]
        %v1154 = vld [vmem:[%s7 + $0x70] sm:$0xff]
        %v1155 = vld [vmem:[%s7 + $0x78] sm:$0xff]
        %v1156 = vld [vmem:[%s7 + $0x80] sm:$0xff]
        %v1157 = vld [vmem:[%s7 + $0x88] sm:$0xff]
        %v1158 = vld [vmem:[%s7 + $0x90] sm:$0xff]
        %v1159 = vld [vmem:[%s7 + $0x98] sm:$0xff]
        %v1160 = vld [vmem:[%s7 + $0xa0] sm:$0xff]
        %v1161 = vld [vmem:[%s7 + $0xa8] sm:$0xff]
        %v1162 = vld [vmem:[%s7 + $0xb0] sm:$0xff]
        %v1163 = vld [vmem:[%s7 + $0xb8] sm:$0xff]
        %v1164 = vld [vmem:[%s7 + $0xc0] sm:$0xff]
        %v1165 = vld [vmem:[%s7 + $0xc8] sm:$0xff]
        %v1166 = vld [vmem:[%s7 + $0xd0] sm:$0xff]
        %v1167 = vld [vmem:[%s7 + $0xd8] sm:$0xff]
        %v1168 = vld [vmem:[%s7 + $0xe0] sm:$0xff]
        %v1169 = vld [vmem:[%s7 + $0xe8] sm:$0xff]
        %v1170 = vld [vmem:[%s7 + $0xf0] sm:$0xff]
        %v1171 = vld [vmem:[%s7 + $0xf8] sm:$0xff]
        %v1172 = vld [vmem:[%s7 + $0x100] sm:$0xff]
        %v1173 = vld [vmem:[%s7 + $0x108] sm:$0xff]
        %v1174 = vld [vmem:[%s7 + $0x110] sm:$0xff]
        %v1175 = vld [vmem:[%s7 + $0x118] sm:$0xff]
        %v1176 = vld [vmem:[%s7 + $0x120] sm:$0xff]
        %v1177 = vld [vmem:[%s7 + $0x128] sm:$0xff]
        %v1178 = vld [vmem:[%s7 + $0x130] sm:$0xff]
        %v1179 = vld [vmem:[%s7 + $0x138] sm:$0xff]
        %v1180 = vld [vmem:[%s7 + $0x140] sm:$0xff]
        %v1181 = vld [vmem:[%s7 + $0x148] sm:$0xff]
        %v1182 = vld [vmem:[%s7 + $0x150] sm:$0xff]
        %v1183 = vld [vmem:[%s7 + $0x158] sm:$0xff]
        %v1184 = vld [vmem:[%s7 + $0x160] sm:$0xff]
        %v1185 = vld [vmem:[%s7 + $0x168] sm:$0xff]
        %v1186 = vld [vmem:[%s7 + $0x170] sm:$0xff]
        %v1187 = vld [vmem:[%s7 + $0x178] sm:$0xff]
        %v1188 = vld [vmem:[%s7 + $0x180] sm:$0xff]
        %v1189 = vld [vmem:[%s7 + $0x188] sm:$0xff]
        %v1190 = vld [vmem:[%s7 + $0x190] sm:$0xff]
        %v1191 = vld [vmem:[%s7 + $0x198] sm:$0xff]
        %v1192 = vld [vmem:[%s7 + $0x1a0] sm:$0xff]
        %v1193 = vld [vmem:[%s7 + $0x1a8] sm:$0xff]
        %v1194 = vld [vmem:[%s7 + $0x1b0] sm:$0xff]
        %v1195 = vld [vmem:[%s7 + $0x1b8] sm:$0xff]
        %v1196 = vld [vmem:[%s7 + $0x1c0] sm:$0xff]
        %v1197 = vld [vmem:[%s7 + $0x1c8] sm:$0xff]
        %v1198 = vld [vmem:[%s7 + $0x1d0] sm:$0xff]
        %v1199 = vld [vmem:[%s7 + $0x1d8] sm:$0xff]
        %v1200 = vld [vmem:[%s7 + $0x1e0] sm:$0xff]
        %v1201 = vld [vmem:[%s7 + $0x1e8] sm:$0xff]
        %v1202 = vld [vmem:[%s7 + $0x1f0] sm:$0xff]
        %v1203 = vld [vmem:[%s7 + $0x1f8] sm:$0xff]
        %v1204 = vld [vmem:[%s7 + $0x200] sm:$0xff]
        %v1205 = vld [vmem:[%s7 + $0x208] sm:$0xff]
        %v1206 = vld [vmem:[%s7 + $0x210] sm:$0xff]
        %v1207 = vld [vmem:[%s7 + $0x218] sm:$0xff]
        %v1208 = vld [vmem:[%s7 + $0x220] sm:$0xff]
        %v1209 = vld [vmem:[%s7 + $0x228] sm:$0xff]
        %v1210 = vld [vmem:[%s7 + $0x230] sm:$0xff]
        %v1211 = vld [vmem:[%s7 + $0x238] sm:$0xff]
        %v1212 = vld [vmem:[%s7 + $0x240] sm:$0xff]
        %v1213 = vld [vmem:[%s7 + $0x248] sm:$0xff]
        %v1214 = vld [vmem:[%s7 + $0x250] sm:$0xff]
        %v1215 = vld [vmem:[%s7 + $0x258] sm:$0xff]
        %v1216 = vld [vmem:[%s7 + $0x260] sm:$0xff]
        %v1217 = vld [vmem:[%s7 + $0x268] sm:$0xff]
        %v1218 = vld [vmem:[%s7 + $0x270] sm:$0xff]
        %v1219 = vld [vmem:[%s7 + $0x278] sm:$0xff]
        %v1220 = vld [vmem:[%s7 + $0x280] sm:$0xff]
        %v1221 = vld [vmem:[%s7 + $0x288] sm:$0xff]
        %v1222 = vld [vmem:[%s7 + $0x290] sm:$0xff]
        %v1223 = vld [vmem:[%s7 + $0x298] sm:$0xff]
        %v1224 = vld [vmem:[%s7 + $0x2a0] sm:$0xff]
        %v1225 = vld [vmem:[%s7 + $0x2a8] sm:$0xff]
        %v1226 = vld [vmem:[%s7 + $0x2b0] sm:$0xff]
        %v1227 = vld [vmem:[%s7 + $0x2b8] sm:$0xff]
        %v1228 = vld [vmem:[%s7 + $0x2c0] sm:$0xff]
        %v1229 = vld [vmem:[%s7 + $0x2c8] sm:$0xff]
        %v1230 = vld [vmem:[%s7 + $0x2d0] sm:$0xff]
        %v1231 = vld [vmem:[%s7 + $0x2d8] sm:$0xff]
        %v1232 = vld [vmem:[%s7 + $0x2e0] sm:$0xff]
        %v1233 = vld [vmem:[%s7 + $0x2e8] sm:$0xff]
        %v1234 = vld [vmem:[%s7 + $0x2f0] sm:$0xff]
        %v1235 = vld [vmem:[%s7 + $0x2f8] sm:$0xff]
        %v1236 = vld [vmem:[%s7 + $0x300] sm:$0xff]
        %v1237 = vld [vmem:[%s7 + $0x308] sm:$0xff]
        %v1238 = vld [vmem:[%s7 + $0x310] sm:$0xff]
        %v1239 = vld [vmem:[%s7 + $0x318] sm:$0xff]
        %v1240 = vld [vmem:[%s7 + $0x320] sm:$0xff]
        %v1241 = vld [vmem:[%s7 + $0x328] sm:$0xff]
        %v1242 = vld [vmem:[%s7 + $0x330] sm:$0xff]
        %v1243 = vld [vmem:[%s7 + $0x338] sm:$0xff]
        %v1244 = vld [vmem:[%s7 + $0x340] sm:$0xff]
        %v1245 = vld [vmem:[%s7 + $0x348] sm:$0xff]
        %v1246 = vld [vmem:[%s7 + $0x350] sm:$0xff]
        %v1247 = vld [vmem:[%s7 + $0x358] sm:$0xff]
        %v1248 = vld [vmem:[%s7 + $0x360] sm:$0xff]
        %v1249 = vld [vmem:[%s7 + $0x368] sm:$0xff]
        %v1250 = vld [vmem:[%s7 + $0x370] sm:$0xff]
        %v1251 = vld [vmem:[%s7 + $0x378] sm:$0xff]
        %v1252 = vld [vmem:[%s7 + $0x380] sm:$0xff]
        %v1253 = vld [vmem:[%s7 + $0x388] sm:$0xff]
        %v1254 = vld [vmem:[%s7 + $0x390] sm:$0xff]
        %v1255 = vld [vmem:[%s7 + $0x398] sm:$0xff]
        %v1256 = vld [vmem:[%s7 + $0x3a0] sm:$0xff]
        %v1257 = vld [vmem:[%s7 + $0x3a8] sm:$0xff]
        %v1258 = vld [vmem:[%s7 + $0x3b0] sm:$0xff]
        %v1259 = vld [vmem:[%s7 + $0x3b8] sm:$0xff]
        %v1260 = vld [vmem:[%s7 + $0x3c0] sm:$0xff]
        %v1261 = vld [vmem:[%s7 + $0x3c8] sm:$0xff]
        %v1262 = vld [vmem:[%s7 + $0x3d0] sm:$0xff]
        %v1263 = vld [vmem:[%s7 + $0x3d8] sm:$0xff]
        %v1264 = vld [vmem:[%s7 + $0x3e0] sm:$0xff]
        %v1265 = vld [vmem:[%s7 + $0x3e8] sm:$0xff]
        %v1266 = vld [vmem:[%s7 + $0x3f0] sm:$0xff]
        %v1267 = vld [vmem:[%s7 + $0x3f8] sm:$0xff]
        %v1268 = vld [vmem:[%s8] sm:$0x3]
        %v1270 = vlaneseq
        %v1271 = vshrl.u32 %v1270, 7
        %v1272 = vsub.s32 0, %v1271
        %v1273 = vrot.slane %v1268, %v1272
        %v1274 = vlaneseq
        %v1275 = vshrl.u32 %v1274, 7
        %v1276 = vsub.s32 1, %v1275
        %v1277 = vrot.slane %v1268, %v1276
        %1280 = vmatprep.subr.mxu0 %v1141
        %1281 = vmatpush1.msra.mxu0 %v1140
        %1282 = vmatprep.subr.mxu0 %v1143
        %1283 = vmatpush1.msra.mxu0 %v1142
        %1284 = vmatprep.subr.mxu0 %v1145
        %1285 = vmatpush1.msra.mxu0 %v1144
        %1286 = vmatprep.subr.mxu0 %v1147
        %1287 = vmatpush1.msra.mxu0 %v1146
        %1288 = vmatprep.subr.mxu0 %v1149
        %1289 = vmatpush1.msra.mxu0 %v1148
        %1290 = vmatprep.subr.mxu0 %v1151
        %1291 = vmatpush1.msra.mxu0 %v1150
        %1292 = vmatprep.subr.mxu0 %v1153
        %1293 = vmatpush1.msra.mxu0 %v1152
        %1294 = vmatprep.subr.mxu0 %v1155
        %1295 = vmatpush1.msra.mxu0 %v1154
        %1296 = vmatprep.subr.mxu0 %v1157
        %1297 = vmatpush1.msra.mxu0 %v1156
        %1298 = vmatprep.subr.mxu0 %v1159
        %1299 = vmatpush1.msra.mxu0 %v1158
        %1300 = vmatprep.subr.mxu0 %v1161
        %1301 = vmatpush1.msra.mxu0 %v1160
        %1302 = vmatprep.subr.mxu0 %v1163
        %1303 = vmatpush1.msra.mxu0 %v1162
        %1304 = vmatprep.subr.mxu0 %v1165
        %1305 = vmatpush1.msra.mxu0 %v1164
        %1306 = vmatprep.subr.mxu0 %v1167
        %1307 = vmatpush1.msra.mxu0 %v1166
        %1308 = vmatprep.subr.mxu0 %v1169
        %1309 = vmatpush1.msra.mxu0 %v1168
        %1310 = vmatprep.subr.mxu0 %v1171
        %1311 = vmatpush1.msra.mxu0 %v1170
        %1312 = vmatprep.subr.mxu0 %v1173
        %1313 = vmatpush1.msra.mxu0 %v1172
        %1314 = vmatprep.subr.mxu0 %v1175
        %1315 = vmatpush1.msra.mxu0 %v1174
        %1316 = vmatprep.subr.mxu0 %v1177
        %1317 = vmatpush1.msra.mxu0 %v1176
        %1318 = vmatprep.subr.mxu0 %v1179
        %1319 = vmatpush1.msra.mxu0 %v1178
        %1320 = vmatprep.subr.mxu0 %v1181
        %1321 = vmatpush1.msra.mxu0 %v1180
        %1322 = vmatprep.subr.mxu0 %v1183
        %1323 = vmatpush1.msra.mxu0 %v1182
        %1324 = vmatprep.subr.mxu0 %v1185
        %1325 = vmatpush1.msra.mxu0 %v1184
        %1326 = vmatprep.subr.mxu0 %v1187
        %1327 = vmatpush1.msra.mxu0 %v1186
        %1328 = vmatprep.subr.mxu0 %v1189
        %1329 = vmatpush1.msra.mxu0 %v1188
        %1330 = vmatprep.subr.mxu0 %v1191
        %1331 = vmatpush1.msra.mxu0 %v1190
        %1332 = vmatprep.subr.mxu0 %v1193
        %1333 = vmatpush1.msra.mxu0 %v1192
        %1334 = vmatprep.subr.mxu0 %v1195
        %1335 = vmatpush1.msra.mxu0 %v1194
        %1336 = vmatprep.subr.mxu0 %v1197
        %1337 = vmatpush1.msra.mxu0 %v1196
        %1338 = vmatprep.subr.mxu0 %v1199
        %1339 = vmatpush1.msra.mxu0 %v1198
        %1340 = vmatprep.subr.mxu0 %v1201
        %1341 = vmatpush1.msra.mxu0 %v1200
        %1342 = vmatprep.subr.mxu0 %v1203
        %1343 = vmatpush1.msra.mxu0 %v1202
        %1344 = vmatprep.mubr.f32.mxu0 %v1133
        %1345 = vmatmul.mubr.f32.gmra.mrb[0].mxu0 %v1132
        %v1346 = vpop.f32.mrb[0].mxu0
        %v1347 = vadd.f32 %v1273, %v1346
        %v1348 = vpop.f32.mrb[0].mxu0
        %v1349 = vadd.f32 %v1277, %v1348
        %1350 = vmatprep.mubr.f32.mxu0 %v1137
        %1351 = vmatmul.mubr.f32.gmra.mrb[0].mxu0 %v1136
        %v1352 = vpop.f32.mrb[0].mxu0
        %v1353 = vadd.f32 %v1273, %v1352
        %v1354 = vpop.f32.mrb[0].mxu0
        %v1355 = vadd.f32 %v1277, %v1354
        %1356 = vdwg.mxu0
        %1357 = vmatprep.subr.mxu0 %v1205
        %1358 = vmatpush1.msra.mxu0 %v1204
        %1359 = vmatprep.subr.mxu0 %v1207
        %1360 = vmatpush1.msra.mxu0 %v1206
        %1361 = vmatprep.subr.mxu0 %v1209
        %1362 = vmatpush1.msra.mxu0 %v1208
        %1363 = vmatprep.subr.mxu0 %v1211
        %1364 = vmatpush1.msra.mxu0 %v1210
        %1365 = vmatprep.subr.mxu0 %v1213
        %1366 = vmatpush1.msra.mxu0 %v1212
        %1367 = vmatprep.subr.mxu0 %v1215
        %1368 = vmatpush1.msra.mxu0 %v1214
        %1369 = vmatprep.subr.mxu0 %v1217
        %1370 = vmatpush1.msra.mxu0 %v1216
        %1371 = vmatprep.subr.mxu0 %v1219
        %1372 = vmatpush1.msra.mxu0 %v1218
        %1373 = vmatprep.subr.mxu0 %v1221
        %1374 = vmatpush1.msra.mxu0 %v1220
        %1375 = vmatprep.subr.mxu0 %v1223
        %1376 = vmatpush1.msra.mxu0 %v1222
        %1377 = vmatprep.subr.mxu0 %v1225
        %1378 = vmatpush1.msra.mxu0 %v1224
        %1379 = vmatprep.subr.mxu0 %v1227
        %1380 = vmatpush1.msra.mxu0 %v1226
        %1381 = vmatprep.subr.mxu0 %v1229
        %1382 = vmatpush1.msra.mxu0 %v1228
        %1383 = vmatprep.subr.mxu0 %v1231
        %1384 = vmatpush1.msra.mxu0 %v1230
        %1385 = vmatprep.subr.mxu0 %v1233
        %1386 = vmatpush1.msra.mxu0 %v1232
        %1387 = vmatprep.subr.mxu0 %v1235
        %1388 = vmatpush1.msra.mxu0 %v1234
        %1389 = vmatprep.subr.mxu0 %v1237
        %1390 = vmatpush1.msra.mxu0 %v1236
        %1391 = vmatprep.subr.mxu0 %v1239
        %1392 = vmatpush1.msra.mxu0 %v1238
        %1393 = vmatprep.subr.mxu0 %v1241
        %1394 = vmatpush1.msra.mxu0 %v1240
        %1395 = vmatprep.subr.mxu0 %v1243
        %1396 = vmatpush1.msra.mxu0 %v1242
        %1397 = vmatprep.subr.mxu0 %v1245
        %1398 = vmatpush1.msra.mxu0 %v1244
        %1399 = vmatprep.subr.mxu0 %v1247
        %1400 = vmatpush1.msra.mxu0 %v1246
        %1401 = vmatprep.subr.mxu0 %v1249
        %1402 = vmatpush1.msra.mxu0 %v1248
        %1403 = vmatprep.subr.mxu0 %v1251
        %1404 = vmatpush1.msra.mxu0 %v1250
        %1405 = vmatprep.subr.mxu0 %v1253
        %1406 = vmatpush1.msra.mxu0 %v1252
        %1407 = vmatprep.subr.mxu0 %v1255
        %1408 = vmatpush1.msra.mxu0 %v1254
        %1409 = vmatprep.subr.mxu0 %v1257
        %1410 = vmatpush1.msra.mxu0 %v1256
        %1411 = vmatprep.subr.mxu0 %v1259
        %1412 = vmatpush1.msra.mxu0 %v1258
        %1413 = vmatprep.subr.mxu0 %v1261
        %1414 = vmatpush1.msra.mxu0 %v1260
        %1415 = vmatprep.subr.mxu0 %v1263
        %1416 = vmatpush1.msra.mxu0 %v1262
        %1417 = vmatprep.subr.mxu0 %v1265
        %1418 = vmatpush1.msra.mxu0 %v1264
        %1419 = vmatprep.subr.mxu0 %v1267
        %1420 = vmatpush1.msra.mxu0 %v1266
        %1421 = vmatprep.mubr.f32.mxu0 %v1135
        %1422 = vmatmul.mubr.f32.gmra.mrb[0].mxu0 %v1134
        %v1423 = vpop.f32.mrb[0].mxu0
        %v1424 = vadd.f32 %v1347, %v1423
        %v1425 = vpop.f32.mrb[0].mxu0
        %v1426 = vadd.f32 %v1349, %v1425
        %1427 = vmatprep.mubr.f32.mxu0 %v1139
        %1428 = vmatmul.mubr.f32.gmra.mrb[0].mxu0 %v1138
        %v1429 = vpop.f32.mrb[0].mxu0
        %v1430 = vadd.f32 %v1353, %v1429
        %v1431 = vpop.f32.mrb[0].mxu0
        %v1432 = vadd.f32 %v1355, %v1431
        %1433 = vdwg.mxu0
        %v1434 = vsub.f32 0.0, %v1424
        %v1435 = vsub.f32 0.0, %v1426
        %v1436 = vsub.f32 0.0, %v1430
        %v1437 = vsub.f32 0.0, %v1432
        %v1438 = vmul.f32 %v1434, 1.442695
        %v1439 = vpow.pop %v1438
        %v1440 = vmul.f32 %v1435, 1.442695
        %v1441 = vpow.pop %v1440
        %v1442 = vmul.f32 %v1436, 1.442695
        %v1443 = vpow.pop %v1442
        %v1444 = vmul.f32 %v1437, 1.442695
        %v1445 = vpow.pop %v1444
        %v1446 = vadd.f32 %v1439, 1.0
        %v1447 = vadd.f32 %v1441, 1.0
        %v1448 = vadd.f32 %v1443, 1.0
        %v1449 = vadd.f32 %v1445, 1.0
        %v1450 = vrcp.pop %v1446
        %v1451 = vrcp.pop %v1447
        %v1452 = vrcp.pop %v1448
        %v1453 = vrcp.pop %v1449
        %1454 = vst [vmem:[%s326] sm:$0xff] %v1450
        %vm1455 = vcmask 523264
        %1456 = vst.msk [vmem:[%s326 + $0x8] sm:$0xff] %vm1455, %v1451
        %1457 = vst [vmem:[%s326 + $0x10] sm:$0xff] %v1452
        %1458 = vst.msk [vmem:[%s326 + $0x18] sm:$0xff] %vm1455, %v1453
        %s1459 = sand.u32 %s225, 1
        %s1460 = scalar_lea.sflag [#allocation3], %s1459
        %s1461 = sand.u32 %s225, 1
        %s1462 = smul.addr %s1461, 32
        %s1463 = scalar_lea.vmem [#allocation2], %s1462
        // Predicated region
        $region57: #{tpu_custom_call.1} parent=55 // pred_check
          %p1464 = pneg %p235
        $region58: #{tpu_custom_call.1} parent=55 // pred_check_branch
          %1466 = sbr.rel (%p1464) target = $region60
        $region59: #{tpu_custom_call.1} parent=55 // pred_region
          %s1467 = smul.u32 2, %s23
          %s1469 = ssub.s32 512, 512
          %1470 = vsyncadd %s1460, %s1469
          %s1471 = smul.addr %s1467, 2
          %s1472 = smul.addr %s1471, 128
          %s1473 = scalar_lea.hbm %s9, %s1472
          %s1474 = sshll.u32 %s1463, 4
          %s1475 = int_to_ptr.vmem [resolvable:$true] %s1474
          %1480 = dma.vmem_to_hbm [thread:$0]  %s1475, 512, %s1473, %s1460, 256, 256, 16
        $region60: #{tpu_custom_call.1} parent=55 // pred_fallthru
          _
      $region56: #{tpu_custom_call.1} parent=5 // pred_fallthru
        _
      %p1481 = scmp.le.s32.totalorder 2, %s18
      // Predicated region
      $region61: #{tpu_custom_call.1} parent=5 // pred_check
        %p1482 = pneg %p1481
      $region62: #{tpu_custom_call.1} parent=5 // pred_check_branch
        %1484 = sbr.rel (%p1482) target = $region64
      $region63: #{tpu_custom_call.1} parent=5 // pred_region
        %s1485 = ssub.s32 %s18, 2
        // Predicated region
        $region65: #{tpu_custom_call.1} parent=63 // pred_check
          %p1486 = pneg %p241
        $region66: #{tpu_custom_call.1} parent=63 // pred_check_branch
          %1488 = sbr.rel (%p1486) target = $region68
        $region67: #{tpu_custom_call.1} parent=63 // pred_region
          %s1489 = sand.u32 %s226, 1
          %s1490 = scalar_lea.sflag [#allocation3], %s1489
          %s1491 = sand.u32 %s226, 1
          %s1492 = smul.addr %s1491, 32
          %s1493 = scalar_lea.vmem [#allocation2], %s1492
          %1494 = dma.done %s1490, 512
        $region68: #{tpu_custom_call.1} parent=63 // pred_fallthru
          _
      $region64: #{tpu_custom_call.1} parent=5 // pred_fallthru
        _
    $region6: #{tpu_custom_call.1} parent=1 // loop_footer
      %s22 = sadd.s32 1, %s18
    $region7: #{tpu_custom_call.1} parent=1 // loop_footer_branch
      %17 = sbr.rel target = $region3
    $region8: #{tpu_custom_call.1} parent=1 // loop_exit
      _
    %1495 = vsyncpa [#allocation3], 1
    %s1496 = scalar_lea.sflag [#allocation3], 1
    %1497 = vsyncpa %s1496, 1

</llo_original>
